<compile_context>
chip_gen: v5e
topology: v5e:2x2
jax: 0.10.0
libtpu: 0.0.40
codegen_flags: <defaults>
</compile_context>

<pallas_src>
import functools
import math

import jax
import jax.numpy as jnp
from jax.experimental import pallas as pl
from jax.experimental.pallas import tpu as pltpu


# ----------------------------------------------------------------------------
# Pallas kernels
# ----------------------------------------------------------------------------
def conv_relu_pool_kernel(xc_ref, w_ref, b_ref, o_ref):
    """Fused 3x3 conv (as one im2col matmul) + bias + ReLU + 2x2 maxpool.

    xc_ref : (1, H, W, 9*Cin)   im2col patches, NHWC, (kh, kw, cin) on lanes
    w_ref  : (9*Cin, Cout)      im2col weight
    b_ref  : (1, Cout)
    o_ref  : (1, H/2, W/2, Cout)
    """
    _, H, W, K9 = xc_ref.shape
    Cout = o_ref.shape[3]

    patch = xc_ref[0].reshape(H * W, K9)                       # (H*W, 27)
    y = jnp.dot(patch, w_ref[...], preferred_element_type=jnp.float32)
    y = jnp.maximum(y + b_ref[...], 0.0)                       # bias + ReLU
    # 2x2/stride-2 max pool, done in-register before the single store.
    y = y.reshape(H // 2, 2, W // 2, 2, Cout)
    m = jnp.maximum(
        jnp.maximum(y[:, 0, :, 0, :], y[:, 0, :, 1, :]),
        jnp.maximum(y[:, 1, :, 0, :], y[:, 1, :, 1, :]),
    )
    o_ref[...] = m.reshape(1, H // 2, W // 2, Cout).astype(o_ref.dtype)


def linear_kernel(x_ref, w_ref, b_ref, o_ref, acc_ref, *, apply_relu):
    """y = x @ W + b (optionally ReLU), accumulated over the K grid axis.

    grid = (N_tiles, K_tiles); K is the last (reduction) axis.
    x_ref : (K_tiles, M, tk)  fully resident activation (constant index_map)
    w_ref : (tk, tn)          streamed bf16 weight tile
    """
    k = pl.program_id(1)

    @pl.when(k == 0)
    def _init():
        acc_ref[...] = jnp.zeros_like(acc_ref)

    acc_ref[...] += jnp.dot(
        x_ref[k], w_ref[...], preferred_element_type=jnp.float32
    )

    @pl.when(k == pl.num_programs(1) - 1)
    def _finalize():
        y = acc_ref[...] + b_ref[...]
        if apply_relu:
            y = jnp.maximum(y, 0.0)
        o_ref[...] = y.astype(o_ref.dtype)


# ----------------------------------------------------------------------------
# Wrappers (glue: layout/pad + pallas_call plumbing)
# ----------------------------------------------------------------------------
def im2col_3x3(x_nhwc):
    """(B,H,W,Cin) -> (B,H,W,9*Cin) patches for a pad=1 3x3 conv (tiny XLA op)."""
    x_pad = jnp.pad(x_nhwc, ((0, 0), (1, 1), (1, 1), (0, 0)))
    H, W = x_nhwc.shape[1], x_nhwc.shape[2]
    cols = [
        x_pad[:, kh:kh + H, kw:kw + W, :]
        for kh in range(3)
        for kw in range(3)
    ]
    return jnp.concatenate(cols, axis=-1)


def conv3x3_relu_pool(x_col, w_col, bias, *, out_dtype=jnp.bfloat16):
    B, H, W, K9 = x_col.shape
    Cout = w_col.shape[1]
    return pl.pallas_call(
        conv_relu_pool_kernel,
        out_shape=jax.ShapeDtypeStruct((B, H // 2, W // 2, Cout), out_dtype),
        grid=(B,),
        in_specs=[
            pl.BlockSpec((1, H, W, K9), lambda b: (b, 0, 0, 0)),
            pl.BlockSpec((K9, Cout), lambda b: (0, 0)),
            pl.BlockSpec((1, Cout), lambda b: (0, 0)),
        ],
        out_specs=pl.BlockSpec((1, H // 2, W // 2, Cout), lambda b: (b, 0, 0, 0)),
        compiler_params=pltpu.CompilerParams(dimension_semantics=("parallel",)),
    )(x_col, w_col, bias.reshape(1, Cout))


def linear(x, w_t, bias, *, relu, tn, tk, out_dtype):
    """PyTorch-style Linear: y = x @ w_t + b with w_t already laid out (K, N)."""
    M, K = x.shape
    Kw, N = w_t.shape
    assert K == Kw and K % tk == 0 and N % tn == 0
    kt = K // tk
    # Resident activation: lay out so the kernel can index the K-chunk on the
    # leading dim (x_ref[k]). Tiny (<= 128 KiB bf16), DMA'd once.
    x_chunks = jnp.transpose(x.reshape(M, kt, tk), (1, 0, 2))
    grid = (N // tn, kt)  # reduction axis (K) last
    kernel = functools.partial(linear_kernel, apply_relu=relu)
    return pl.pallas_call(
        kernel,
        out_shape=jax.ShapeDtypeStruct((M, N), out_dtype),
        grid=grid,
        in_specs=[
            pl.BlockSpec((kt, M, tk), lambda j, k: (0, 0, 0)),  # resident x
            pl.BlockSpec((tk, tn), lambda j, k: (k, j)),        # streamed W
            pl.BlockSpec((1, tn), lambda j, k: (0, j)),
        ],
        out_specs=pl.BlockSpec((M, tn), lambda j, k: (0, j)),
        scratch_shapes=[pltpu.VMEM((M, tn), jnp.float32)],
        compiler_params=pltpu.CompilerParams(
            dimension_semantics=("parallel", "arbitrary"),
            vmem_limit_bytes=32 * 1024 * 1024,
        ),
    )(x_chunks, w_t, bias.reshape(1, N))


def vgg_forward(x_nchw, p, *, num_classes=10):
    """Full VGG forward: features -> flatten -> classifier."""
    B = x_nchw.shape[0]
    # features: conv3x3 + ReLU + maxpool, fused into one kernel (im2col glue).
    x_nhwc = jnp.transpose(x_nchw, (0, 2, 3, 1))              # (B,16,16,3), tiny
    x_col = im2col_3x3(x_nhwc)                                # (B,16,16,27), tiny
    y = conv3x3_relu_pool(x_col, p["w_col"], p["b_conv"])     # (B,8,8,512) bf16
    # Flatten directly in NHWC order; the NCHW permutation that torch's
    # x.view(B, -1) implies is folded into w1 at parameter-prep time.
    flat = y.reshape(B, -1)                                   # (B, 32768) bf16
    # classifier (Dropout == identity in eval mode)
    h1 = linear(flat, p["w1_t"], p["b1"], relu=True, tn=512, tk=8192,
                out_dtype=jnp.bfloat16)                       # (B, 2048)
    h2 = linear(h1, p["w2_t"], p["b2"], relu=True, tn=512, tk=2048,
                out_dtype=jnp.bfloat16)                       # (B, 4096)
    logits_pad = linear(h2, p["w3_t"], p["b3"], relu=False, tn=128, tk=4096,
                        out_dtype=jnp.float32)                # (B, 128) padded
    return logits_pad[:, :num_classes]


# ----------------------------------------------------------------------------
# Parameter prep: one-time layout/precision work, nothing done per forward.
# ----------------------------------------------------------------------------
def prepare_params(params):
    (w_conv, b_conv, w1, b1, w2, b2, w3, b3) = params
    Cout, Cin = w_conv.shape[0], w_conv.shape[1]
    # conv taps OIHW -> (kh, kw, cin, cout) -> (9*Cin, Cout) im2col layout.
    w_col = jnp.transpose(w_conv, (2, 3, 1, 0)).reshape(9 * Cin, Cout)

    # Fold NCHW flatten into w1: permute its input columns from (c,h,w) order
    # to NHWC (h,w,c) order, then store pre-transposed (K, N) in bf16.
    N1, K1 = w1.shape
    C, Hf, Wf = 512, 8, 8
    assert K1 == C * Hf * Wf
    w1_nhwc = jnp.transpose(w1.reshape(N1, C, Hf, Wf), (0, 2, 3, 1)).reshape(N1, K1)
    w1_t = jnp.transpose(w1_nhwc).astype(jnp.bfloat16)        # (32768, 2048)
    w2_t = jnp.transpose(w2).astype(jnp.bfloat16)             # (2048, 4096)

    # Final layer: pre-transpose and pad N: 10 -> 128 for lane-dense stores.
    N3 = w3.shape[0]
    w3_t = jnp.pad(jnp.transpose(w3), ((0, 0), (0, 128 - N3))).astype(jnp.bfloat16)
    b3_p = jnp.pad(b3, (0, 128 - N3))

    return dict(w_col=w_col, b_conv=b_conv,
                w1_t=w1_t, b1=b1, w2_t=w2_t, b2=b2, w3_t=w3_t, b3=b3_p)


# ----------------------------------------------------------------------------
# Pure-JAX reference (f32, torch layout) for correctness check only
# ----------------------------------------------------------------------------
def vgg_reference(x_nchw, params):
    (w_conv, b_conv, w1, b1, w2, b2, w3, b3) = params
    y = jax.lax.conv_general_dilated(
        x_nchw, w_conv, (1, 1), ((1, 1), (1, 1)),
        dimension_numbers=("NCHW", "OIHW", "NCHW"),
    )
    y = jnp.maximum(y + b_conv.reshape(1, -1, 1, 1), 0.0)
    B, C, H, W = y.shape
    y = y.reshape(B, C, H // 2, 2, W // 2, 2).max(axis=(3, 5))
    f = y.reshape(B, -1)
    h1 = jnp.maximum(f @ w1.T + b1, 0.0)
    h2 = jnp.maximum(h1 @ w2.T + b2, 0.0)
    return h2 @ w3.T + b3


# ----------------------------------------------------------------------------
# Parameter init (deterministic, mirroring kaiming_normal_ / default bias init)
# ----------------------------------------------------------------------------
def init_params(key):
    ks = jax.random.split(key, 8)

    def kaiming(k, shape, fan_in):
        return jax.random.normal(k, shape, jnp.float32) * math.sqrt(2.0 / fan_in)

    def bias(k, shape, fan_in):
        bound = 1.0 / math.sqrt(fan_in)
        return jax.random.uniform(k, shape, jnp.float32, -bound, bound)

    w_conv = kaiming(ks[0], (512, 3, 3, 3), 3 * 3 * 3)        # OIHW
    b_conv = bias(ks[1], (512,), 3 * 3 * 3)
    w1 = kaiming(ks[2], (2048, 512 * 8 * 8), 512 * 8 * 8)     # (out, in)
    b1 = bias(ks[3], (2048,), 512 * 8 * 8)
    w2 = kaiming(ks[4], (4096, 2048), 2048)
    b2 = bias(ks[5], (4096,), 2048)
    w3 = kaiming(ks[6], (10, 4096), 4096)
    b3 = bias(ks[7], (10,), 4096)
    return (w_conv, b_conv, w1, b1, w2, b2, w3, b3)


if __name__ == "__main__":
    root = jax.random.PRNGKey(0)
    k_params, k_x = jax.random.split(root)
    params = init_params(k_params)
    prepared = prepare_params(params)          # one-time layout / bf16 prep
    x = jax.random.normal(k_x, (2, 3, 16, 16), jnp.float32)  # NCHW, like PyTorch

    out = jax.block_until_ready(vgg_forward(x, prepared))
    ref = jax.block_until_ready(vgg_reference(x, params))

    assert out.shape == (2, 10), out.shape
    # bf16 weight/activation streaming with f32 accumulation -> small drift.
    assert jnp.allclose(out, ref, rtol=2e-2, atol=2e-2), (
        "mismatch vs reference: max abs diff "
        f"{float(jnp.max(jnp.abs(out - ref)))}"
    )
    print("KERNEL_OK")
</pallas_src>

<mosaic_0001>
module attributes {stable_mosaic.version = 11 : i64} {
  func.func @conv_relu_pool_kernel(%arg0: i32, %arg1: memref<1x16x16x27xf32, #tpu.memory_space<vmem>>, %arg2: memref<27x512xf32, #tpu.memory_space<vmem>>, %arg3: memref<1x512xf32, #tpu.memory_space<vmem>>, %arg4: memref<1x8x8x512xbf16, #tpu.memory_space<vmem>>) attributes {dimension_semantics = [#tpu.dimension_semantics<parallel>], iteration_bounds = array<i64: 2>, scalar_prefetch = 0 : i64, scratch_operands = 0 : i64, tpu.core_type = #tpu.core_type<tc>, window_params = [{transform_indices = @transform_0, window_bounds = array<i64: 1, 16, 16, 27>}, {pipeline_mode = #tpu.pipeline_mode<synchronous>, transform_indices = @transform_1, window_bounds = array<i64: 27, 512>}, {pipeline_mode = #tpu.pipeline_mode<synchronous>, transform_indices = @transform_2, window_bounds = array<i64: 1, 512>}, {transform_indices = @transform_3, window_bounds = array<i64: 1, 8, 8, 512>}]} {
    %c0 = arith.constant 0 : index
    %c0_0 = arith.constant 0 : index
    %c0_1 = arith.constant 0 : index
    %c0_2 = arith.constant 0 : index
    %0 = vector.load %arg1[%c0, %c0_0, %c0_1, %c0_2] : memref<1x16x16x27xf32, #tpu.memory_space<vmem>>, vector<1x16x16x27xf32>
    %1 = vector.shape_cast %0 : vector<1x16x16x27xf32> to vector<16x16x27xf32>
    %2 = vector.shape_cast %1 : vector<16x16x27xf32> to vector<256x27xf32>
    %c0_3 = arith.constant 0 : index
    %c0_4 = arith.constant 0 : index
    %3 = vector.load %arg2[%c0_3, %c0_4] : memref<27x512xf32, #tpu.memory_space<vmem>>, vector<27x512xf32>
    %cst = arith.constant dense<0.000000e+00> : vector<256x512xf32>
    %4 = tpu.matmul %2, %3, %cst {dimension_numbers = #tpu.dot_dimension_numbers<[1], [0], [0], [1], [0, 0, 1, 1], [], []>} : vector<256x27xf32>, vector<27x512xf32>, vector<256x512xf32> -> vector<256x512xf32>
    %c0_5 = arith.constant 0 : index
    %c0_6 = arith.constant 0 : index
    %5 = vector.load %arg3[%c0_5, %c0_6] : memref<1x512xf32, #tpu.memory_space<vmem>>, vector<1x512xf32>
    %6 = vector.broadcast %5 : vector<1x512xf32> to vector<256x512xf32>
    %7 = arith.addf %4, %6 : vector<256x512xf32>
    %cst_7 = arith.constant 0.000000e+00 : f32
    %8 = vector.broadcast %cst_7 : f32 to vector<256x512xf32>
    %9 = arith.maximumf %7, %8 : vector<256x512xf32>
    %10 = vector.shape_cast %9 : vector<256x512xf32> to vector<8x2x8x2x512xf32>
    %11 = vector.extract_strided_slice %10 {offsets = [0, 0, 0, 0, 0], sizes = [8, 1, 8, 1, 512], strides = [1, 1, 1, 1, 1]} : vector<8x2x8x2x512xf32> to vector<8x1x8x1x512xf32>
    %12 = vector.shape_cast %11 : vector<8x1x8x1x512xf32> to vector<8x8x512xf32>
    %13 = vector.extract_strided_slice %10 {offsets = [0, 0, 0, 1, 0], sizes = [8, 1, 8, 1, 512], strides = [1, 1, 1, 1, 1]} : vector<8x2x8x2x512xf32> to vector<8x1x8x1x512xf32>
    %14 = vector.shape_cast %13 : vector<8x1x8x1x512xf32> to vector<8x8x512xf32>
    %15 = arith.maximumf %12, %14 : vector<8x8x512xf32>
    %16 = vector.extract_strided_slice %10 {offsets = [0, 1, 0, 0, 0], sizes = [8, 1, 8, 1, 512], strides = [1, 1, 1, 1, 1]} : vector<8x2x8x2x512xf32> to vector<8x1x8x1x512xf32>
    %17 = vector.shape_cast %16 : vector<8x1x8x1x512xf32> to vector<8x8x512xf32>
    %18 = vector.extract_strided_slice %10 {offsets = [0, 1, 0, 1, 0], sizes = [8, 1, 8, 1, 512], strides = [1, 1, 1, 1, 1]} : vector<8x2x8x2x512xf32> to vector<8x1x8x1x512xf32>
    %19 = vector.shape_cast %18 : vector<8x1x8x1x512xf32> to vector<8x8x512xf32>
    %20 = arith.maximumf %17, %19 : vector<8x8x512xf32>
    %21 = arith.maximumf %15, %20 : vector<8x8x512xf32>
    %22 = vector.shape_cast %21 : vector<8x8x512xf32> to vector<1x8x8x512xf32>
    %23 = arith.truncf %22 : vector<1x8x8x512xf32> to vector<1x8x8x512xbf16>
    %c0_8 = arith.constant 0 : index
    %c0_9 = arith.constant 0 : index
    %c0_10 = arith.constant 0 : index
    %c0_11 = arith.constant 0 : index
    %24 = vector.load %arg4[%c0_8, %c0_9, %c0_10, %c0_11] : memref<1x8x8x512xbf16, #tpu.memory_space<vmem>>, vector<1x8x8x512xbf16>
    tpu.vector_store %arg4[%c0_8, %c0_9, %c0_10, %c0_11], %23 {strides = array<i32>} : memref<1x8x8x512xbf16, #tpu.memory_space<vmem>>, vector<1x8x8x512xbf16>,
    return
  }
  func.func @transform_0(%arg0: i32) -> (i32, i32, i32, i32) {
    %c0_i32 = arith.constant 0 : i32
    %c0_i32_0 = arith.constant 0 : i32
    %c0_i32_1 = arith.constant 0 : i32
    %c0_i32_2 = arith.constant 0 : i32
    return %arg0, %c0_i32, %c0_i32_0, %c0_i32_1 : i32, i32, i32, i32
  }
  func.func @transform_1(%arg0: i32) -> (i32, i32) {
    %c0_i32 = arith.constant 0 : i32
    %c0_i32_0 = arith.constant 0 : i32
    %c0_i32_1 = arith.constant 0 : i32
    return %c0_i32, %c0_i32_0 : i32, i32
  }
  func.func @transform_2(%arg0: i32) -> (i32, i32) {
    %c0_i32 = arith.constant 0 : i32
    %c0_i32_0 = arith.constant 0 : i32
    %c0_i32_1 = arith.constant 0 : i32
    return %c0_i32, %c0_i32_0 : i32, i32
  }
  func.func @transform_3(%arg0: i32) -> (i32, i32, i32, i32) {
    %c0_i32 = arith.constant 0 : i32
    %c0_i32_0 = arith.constant 0 : i32
    %c0_i32_1 = arith.constant 0 : i32
    %c0_i32_2 = arith.constant 0 : i32
    return %arg0, %c0_i32, %c0_i32_0, %c0_i32_1 : i32, i32, i32, i32
  }
}

</mosaic_0001>

<llo_original>
// kernel: tpu_custom_call.1
$region0: #{tpu_custom_call.1}
  #allocation0 [shape = 'u32[]', space=smem, size = 0x4, offset = 0x4, fixed_abs, tag = 'smem constant byte address 0x4 - core index']
  #allocation1 [shape = 'u32[72,128]{1,0:T(1,128)}', space=vmem, size = 0x9000, scoped, tag = 'internal scratch']
  %s0 = inlined_call_operand.hbm [shape: f32[2,16,16,27], index: 0, kind: input, shape index: {}]
  %s1 = inlined_call_operand.hbm [shape: f32[27,512], index: 1, kind: input, shape index: {}]
  %s2 = inlined_call_operand.hbm [shape: f32[1,512], index: 2, kind: input, shape index: {}]
  %s3 = inlined_call_operand.hbm [shape: bf16[2,8,8,512], index: 3, kind: output, shape index: {}]
  %s4 = sld [smem:[#allocation0]]
  $region57: #{tpu_custom_call.1} parent=0
    _
  %s6 = ssub.s32 1, %s4
  %s7 = scalar_select 0, %s6, %s4
  $region1: #{tpu_custom_call.1} parent=0
    #allocation2 [shape = 'u8[262144]{0}', space=vmem, size = 0x40000, scoped, tag = 'input window, operand 0']
    #allocation3 [shape = 's32[2]{0}', space=sflag, size = 0x8, scoped, tag = 'scoped memory for tpu_custom_call.1']
    #allocation4 [shape = 's32[2]{0}', space=sflag, size = 0x8, scoped, tag = 'scoped memory for tpu_custom_call.1']
    #allocation5 [shape = 'u8[65536]{0}', space=vmem, size = 0x10000, scoped, tag = 'input window, operand 1, single buffered']
    #allocation6 [shape = 's32[1]{0}', space=sflag, size = 0x4, scoped, tag = 'scoped memory for tpu_custom_call.1']
    #allocation7 [shape = 'u8[2048]{0}', space=vmem, size = 0x800, scoped, tag = 'input window, operand 2, single buffered']
    #allocation8 [shape = 'u8[131072]{0}', space=vmem, size = 0x20000, scoped, tag = 'output window, operand 0']
    %8 = vsyncpa [#allocation3], 0
    %s9 = scalar_lea.sflag [#allocation3], 1
    %10 = vsyncpa %s9, 0
    %11 = vsyncpa [#allocation6], 0
    %12 = vsyncpa [#allocation4], 0
    %s13 = scalar_lea.sflag [#allocation4], 1
    %14 = vsyncpa %s13, 0
    loop: start=0, step=1, limit=4
    $region2: #{tpu_custom_call.1} parent=1 // loop_pre_header
      _
    $region3: #{tpu_custom_call.1} parent=1 // loop_header
      %s16 = sphi 0, %s20
      %p17 = scmp.ge.s32.totalorder %s16, 4
      %s26 = sphi 0, %s28
      %s29 = sphi 0, %s26
      %s30 = sphi 0, %s29
      %s46 = sphi 0, %s30
      %s50 = sphi 0, %s50
      %s52 = sphi 0, %s50
      %s53 = sphi 0, %s52
      %s67 = sphi 0, %s53
      %s71 = sphi 0, %s71
      %s73 = sphi 0, %s71
      %s74 = sphi 0, %s73
      %s88 = sphi 0, %s74
      %s94 = sphi 0, %s96
      %s97 = sphi 0, %s94
      %s98 = sphi 0, %s97
      %s114 = sphi 0, %s98
    $region4: #{tpu_custom_call.1} parent=1 // loop_header_branch
      %19 = sbr.rel (%p17) target = $region8
    $region5: #{tpu_custom_call.1} parent=1 // loop_body
      %s21 = ssub.s32 %s16, 1
      %s22 = ssub.s32 %s16, 2
      %s23 = sadd.s32 %s16, 1
      %s24 = ssub.s32 %s16, %s23
      %p25 = scmp.eq.s32.totalorder %s24, 0
      %s27 = sadd.s32 %s26, 1
      %s28 = scalar_select %p25, %s26, %s27
      %p31 = pneg %p25
      %p32 = scmp.eq.s32.totalorder %s16, 1
      %p33 = por %p31, %p32
      %p34 = scmp.ne.s32.totalorder %s26, %s29
      %p35 = scmp.eq.s32.totalorder %s16, 0
      %p36 = por %p34, %p35
      %p37 = scmp.ne.s32.totalorder %s26, %s29
      %p38 = scmp.eq.s32.totalorder %s21, 1
      %p39 = por %p37, %p38
      %p40 = scmp.ne.s32.totalorder %s29, %s30
      %p41 = scmp.eq.s32.totalorder %s21, 0
      %p42 = por %p40, %p41
      %p43 = scmp.ne.s32.totalorder %s29, %s30
      %p44 = scmp.eq.s32.totalorder %s22, 1
      %p45 = por %p43, %p44
      %p47 = scmp.ne.s32.totalorder %s30, %s46
      %p48 = scmp.eq.s32.totalorder %s22, 0
      %p49 = por %p47, %p48
      %s51 = sadd.s32 %s50, 1
      %p54 = scmp.eq.s32.totalorder %s16, 1
      %p55 = scmp.ne.s32.totalorder %s50, %s52
      %p56 = scmp.eq.s32.totalorder %s16, 0
      %p57 = por %p55, %p56
      %p58 = scmp.ne.s32.totalorder %s50, %s52
      %p59 = scmp.eq.s32.totalorder %s21, 1
      %p60 = por %p58, %p59
      %p61 = scmp.ne.s32.totalorder %s52, %s53
      %p62 = scmp.eq.s32.totalorder %s21, 0
      %p63 = por %p61, %p62
      %p64 = scmp.ne.s32.totalorder %s52, %s53
      %p65 = scmp.eq.s32.totalorder %s22, 1
      %p66 = por %p64, %p65
      %p68 = scmp.ne.s32.totalorder %s53, %s67
      %p69 = scmp.eq.s32.totalorder %s22, 0
      %p70 = por %p68, %p69
      %s72 = sadd.s32 %s71, 1
      %p75 = scmp.eq.s32.totalorder %s16, 1
      %p76 = scmp.ne.s32.totalorder %s71, %s73
      %p77 = scmp.eq.s32.totalorder %s16, 0
      %p78 = por %p76, %p77
      %p79 = scmp.ne.s32.totalorder %s71, %s73
      %p80 = scmp.eq.s32.totalorder %s21, 1
      %p81 = por %p79, %p80
      %p82 = scmp.ne.s32.totalorder %s73, %s74
      %p83 = scmp.eq.s32.totalorder %s21, 0
      %p84 = por %p82, %p83
      %p85 = scmp.ne.s32.totalorder %s73, %s74
      %p86 = scmp.eq.s32.totalorder %s22, 1
      %p87 = por %p85, %p86
      %p89 = scmp.ne.s32.totalorder %s74, %s88
      %p90 = scmp.eq.s32.totalorder %s22, 0
      %p91 = por %p89, %p90
      %s92 = ssub.s32 %s16, %s23
      %p93 = scmp.eq.s32.totalorder %s92, 0
      %s95 = sadd.s32 %s94, 1
      %s96 = scalar_select %p93, %s94, %s95
      %p99 = pneg %p93
      %p100 = scmp.eq.s32.totalorder %s16, 1
      %p101 = por %p99, %p100
      %p102 = scmp.ne.s32.totalorder %s94, %s97
      %p103 = scmp.eq.s32.totalorder %s16, 0
      %p104 = por %p102, %p103
      %p105 = scmp.ne.s32.totalorder %s94, %s97
      %p106 = scmp.eq.s32.totalorder %s21, 1
      %p107 = por %p105, %p106
      %p108 = scmp.ne.s32.totalorder %s97, %s98
      %p109 = scmp.eq.s32.totalorder %s21, 0
      %p110 = por %p108, %p109
      %p111 = scmp.ne.s32.totalorder %s97, %s98
      %p112 = scmp.eq.s32.totalorder %s22, 1
      %p113 = por %p111, %p112
      %p115 = scmp.ne.s32.totalorder %s98, %s114
      %p116 = scmp.eq.s32.totalorder %s22, 0
      %p117 = por %p115, %p116
      %p118 = scmp.le.s32.totalorder 1, %s16
      %p119 = scmp.lt.s32.totalorder %s16, 3
      %p120 = pnand %p118, %p119
      %p121 = pneg %p120
      // Predicated region
      $region9: #{tpu_custom_call.1} parent=5 // pred_check
        _
      $region10: #{tpu_custom_call.1} parent=5 // pred_check_branch
        %123 = sbr.rel (%p120) target = $region12
      $region11: #{tpu_custom_call.1} parent=5 // pred_region
        %s124 = ssub.s32 %s16, 1
        // Predicated region
        $region13: #{tpu_custom_call.1} parent=11 // pred_check
          %p125 = pneg %p63
        $region14: #{tpu_custom_call.1} parent=11 // pred_check_branch
          %127 = sbr.rel (%p125) target = $region16
        $region15: #{tpu_custom_call.1} parent=11 // pred_region
          %129 = vsyncadd [#allocation6], 0
          %s130 = sshll.u32 %s1, 4
          %s131 = int_to_ptr.hbm [resolvable:$true] %s130
          %s132 = sshll.u32 [#allocation5], 4
          %s133 = int_to_ptr.vmem [resolvable:$true] %s132
          %138 = dma.hbm_to_vmem [thread:$0]  %s131, 2048, %s133, [#allocation6], 512, 512, 32
        $region16: #{tpu_custom_call.1} parent=11 // pred_fallthru
          _
        // Predicated region
        $region17: #{tpu_custom_call.1} parent=11 // pred_check
          %p139 = pneg %p84
        $region18: #{tpu_custom_call.1} parent=11 // pred_check_branch
          %141 = sbr.rel (%p139) target = $region20
        $region19: #{tpu_custom_call.1} parent=11 // pred_region
          %143 = vsyncadd [#allocation6], 0
          %s145 = sshll.u32 %s2, 4
          %s146 = int_to_ptr.hbm [resolvable:$true] %s145
          %s147 = sshll.u32 [#allocation7], 4
          %s148 = int_to_ptr.vmem [resolvable:$true] %s147
          %150 = dma.hbm_to_vmem [thread:$0]  %s146, 64, %s148, [#allocation6]
        $region20: #{tpu_custom_call.1} parent=11 // pred_fallthru
          _
      $region12: #{tpu_custom_call.1} parent=5 // pred_fallthru
        _
      %p151 = scmp.lt.s32.totalorder %s16, 2
      // Predicated region
      $region21: #{tpu_custom_call.1} parent=5 // pred_check
        %p152 = pneg %p151
      $region22: #{tpu_custom_call.1} parent=5 // pred_check_branch
        %154 = sbr.rel (%p152) target = $region24
      $region23: #{tpu_custom_call.1} parent=5 // pred_region
        // Predicated region
        $region25: #{tpu_custom_call.1} parent=23 // pred_check
          %p155 = pneg %p36
        $region26: #{tpu_custom_call.1} parent=23 // pred_check_branch
          %157 = sbr.rel (%p155) target = $region28
        $region27: #{tpu_custom_call.1} parent=23 // pred_region
          %s158 = sand.u32 %s26, 1
          %s159 = scalar_lea.sflag [#allocation3], %s158
          %s160 = sand.u32 %s26, 1
          %s161 = smul.addr %s160, 256
          %s162 = scalar_lea.vmem [#allocation2], %s161
          %164 = vsyncadd %s159, 0
          %s165 = smul.addr %s16, 32
          %s166 = smul.addr %s165, 8
          %s167 = scalar_lea.hbm %s0, %s166
          %s168 = sshll.u32 %s167, 4
          %s169 = int_to_ptr.hbm [resolvable:$true] %s168
          %s170 = sshll.u32 %s162, 4
          %s171 = int_to_ptr.vmem [resolvable:$true] %s170
          %176 = dma.hbm_to_vmem [thread:$0]  %s169, 4096, %s171, %s159, 128, 128, 8
        $region28: #{tpu_custom_call.1} parent=23 // pred_fallthru
          _
      $region24: #{tpu_custom_call.1} parent=5 // pred_fallthru
        _
      %p177 = scmp.le.s32.totalorder 1, %s16
      %p178 = scmp.lt.s32.totalorder %s16, 3
      %p179 = pnand %p177, %p178
      %p180 = pneg %p179
      // Predicated region
      $region29: #{tpu_custom_call.1} parent=5 // pred_check
        _
      $region30: #{tpu_custom_call.1} parent=5 // pred_check_branch
        %182 = sbr.rel (%p179) target = $region32
      $region31: #{tpu_custom_call.1} parent=5 // pred_region
        %s183 = ssub.s32 %s16, 1
        %s184 = sand.u32 %s29, 1
        %s185 = scalar_lea.sflag [#allocation3], %s184
        %s186 = sand.u32 %s29, 1
        %s187 = smul.addr %s186, 256
        %s188 = scalar_lea.vmem [#allocation2], %s187
        // Predicated region
        $region33: #{tpu_custom_call.1} parent=31 // pred_check
          %p189 = pneg %p42
        $region34: #{tpu_custom_call.1} parent=31 // pred_check_branch
          %191 = sbr.rel (%p189) target = $region36
        $region35: #{tpu_custom_call.1} parent=31 // pred_region
          %193 = dma.done %s185, 4096
        $region36: #{tpu_custom_call.1} parent=31 // pred_fallthru
          _
        // Predicated region
        $region37: #{tpu_custom_call.1} parent=31 // pred_check
          %p194 = pneg %p63
        $region38: #{tpu_custom_call.1} parent=31 // pred_check_branch
          %196 = sbr.rel (%p194) target = $region40
        $region39: #{tpu_custom_call.1} parent=31 // pred_region
          %198 = dma.done [#allocation6], 2048
        $region40: #{tpu_custom_call.1} parent=31 // pred_fallthru
          _
        // Predicated region
        $region41: #{tpu_custom_call.1} parent=31 // pred_check
          %p199 = pneg %p84
        $region42: #{tpu_custom_call.1} parent=31 // pred_check_branch
          %201 = sbr.rel (%p199) target = $region44
        $region43: #{tpu_custom_call.1} parent=31 // pred_region
          %203 = dma.done [#allocation6], 64
        $region44: #{tpu_custom_call.1} parent=31 // pred_fallthru
          _
        %s204 = sand.u32 %s29, 1
        %s205 = scalar_lea.sflag [#allocation3], %s204
        %s206 = sand.u32 %s29, 1
        %s207 = smul.addr %s206, 256
        %s208 = scalar_lea.vmem [#allocation2], %s207
        %p209 = pneg %p42
        %p210 = pneg %p39
        %p211 = pneg %p63
        %p212 = pneg %p60
        %p213 = pneg %p84
        %p214 = pneg %p81
        %p215 = pneg %p110
        %p216 = pneg %p107
        %s217 = sand.u32 %s97, 1
        %s218 = scalar_lea.sflag [#allocation4], %s217
        %s219 = sand.u32 %s97, 1
        %s220 = smul.addr %s219, 128
        %s221 = scalar_lea.vmem [#allocation8], %s220
        %v222 = vld [vmem:[%s188] sm:$0xff]
        %v223 = vld [vmem:[%s188 + $0x8] sm:$0xff]
        %v224 = vld [vmem:[%s188 + $0x10] sm:$0xff]
        %v225 = vld [vmem:[%s188 + $0x18] sm:$0xff]
        %v226 = vld [vmem:[%s188 + $0x20] sm:$0xff]
        %v227 = vld [vmem:[%s188 + $0x28] sm:$0xff]
        %v228 = vld [vmem:[%s188 + $0x30] sm:$0xff]
        %v229 = vld [vmem:[%s188 + $0x38] sm:$0xff]
        %v230 = vld [vmem:[%s188 + $0x40] sm:$0xff]
        %v231 = vld [vmem:[%s188 + $0x48] sm:$0xff]
        %v232 = vld [vmem:[%s188 + $0x50] sm:$0xff]
        %v233 = vld [vmem:[%s188 + $0x58] sm:$0xff]
        %v234 = vld [vmem:[%s188 + $0x60] sm:$0xff]
        %v235 = vld [vmem:[%s188 + $0x68] sm:$0xff]
        %v236 = vld [vmem:[%s188 + $0x70] sm:$0xff]
        %v237 = vld [vmem:[%s188 + $0x78] sm:$0xff]
        %v238 = vld [vmem:[%s188 + $0x80] sm:$0xff]
        %v239 = vld [vmem:[%s188 + $0x88] sm:$0xff]
        %v240 = vld [vmem:[%s188 + $0x90] sm:$0xff]
        %v241 = vld [vmem:[%s188 + $0x98] sm:$0xff]
        %v242 = vld [vmem:[%s188 + $0xa0] sm:$0xff]
        %v243 = vld [vmem:[%s188 + $0xa8] sm:$0xff]
        %v244 = vld [vmem:[%s188 + $0xb0] sm:$0xff]
        %v245 = vld [vmem:[%s188 + $0xb8] sm:$0xff]
        %v246 = vld [vmem:[%s188 + $0xc0] sm:$0xff]
        %v247 = vld [vmem:[%s188 + $0xc8] sm:$0xff]
        %v248 = vld [vmem:[%s188 + $0xd0] sm:$0xff]
        %v249 = vld [vmem:[%s188 + $0xd8] sm:$0xff]
        %v250 = vld [vmem:[%s188 + $0xe0] sm:$0xff]
        %v251 = vld [vmem:[%s188 + $0xe8] sm:$0xff]
        %v252 = vld [vmem:[%s188 + $0xf0] sm:$0xff]
        %v253 = vld [vmem:[%s188 + $0xf8] sm:$0xff]
        %v254 = vld [vmem:[#allocation5] sm:$0xff]
        %v255 = vld [vmem:[#allocation5 + $0x8] sm:$0xff]
        %v256 = vld [vmem:[#allocation5 + $0x10] sm:$0xff]
        %v257 = vld [vmem:[#allocation5 + $0x18] sm:$0xff]
        %v258 = vld [vmem:[#allocation5 + $0x20] sm:$0xff]
        %v259 = vld [vmem:[#allocation5 + $0x28] sm:$0xff]
        %v260 = vld [vmem:[#allocation5 + $0x30] sm:$0xff]
        %v261 = vld [vmem:[#allocation5 + $0x38] sm:$0xff]
        %v262 = vld [vmem:[#allocation5 + $0x40] sm:$0xff]
        %v263 = vld [vmem:[#allocation5 + $0x48] sm:$0xff]
        %v264 = vld [vmem:[#allocation5 + $0x50] sm:$0xff]
        %v265 = vld [vmem:[#allocation5 + $0x58] sm:$0xff]
        %v266 = vld [vmem:[#allocation5 + $0x60] sm:$0x7]
        %v267 = vld [vmem:[#allocation5 + $0x68] sm:$0x7]
        %v268 = vld [vmem:[#allocation5 + $0x70] sm:$0x7]
        %v269 = vld [vmem:[#allocation5 + $0x78] sm:$0x7]
        %v270 = vld [vmem:[#allocation7] sm:$0xf]
        %v272 = vperm.slane %v270, 0
        %v273 = vperm.slane %v270, 1
        %v274 = vperm.slane %v270, 2
        %v275 = vperm.slane %v270, 3
        %vm280 = vcmask 220160
        %v282 = vsel %vm280, %v222, 0
        %v285 = vsel %vm280, %v223, 0
        %v288 = vsel %vm280, %v224, 0
        %v291 = vsel %vm280, %v225, 0
        %v294 = vsel %vm280, %v226, 0
        %v297 = vsel %vm280, %v227, 0
        %v300 = vsel %vm280, %v228, 0
        %v303 = vsel %vm280, %v229, 0
        %v306 = vsel %vm280, %v230, 0
        %v309 = vsel %vm280, %v231, 0
        %v312 = vsel %vm280, %v232, 0
        %v315 = vsel %vm280, %v233, 0
        %v318 = vsel %vm280, %v234, 0
        %v321 = vsel %vm280, %v235, 0
        %v324 = vsel %vm280, %v236, 0
        %v327 = vsel %vm280, %v237, 0
        %v330 = vsel %vm280, %v238, 0
        %v333 = vsel %vm280, %v239, 0
        %v336 = vsel %vm280, %v240, 0
        %v339 = vsel %vm280, %v241, 0
        %v342 = vsel %vm280, %v242, 0
        %v345 = vsel %vm280, %v243, 0
        %v348 = vsel %vm280, %v244, 0
        %v351 = vsel %vm280, %v245, 0
        %v354 = vsel %vm280, %v246, 0
        %v357 = vsel %vm280, %v247, 0
        %v360 = vsel %vm280, %v248, 0
        %v363 = vsel %vm280, %v249, 0
        %v366 = vsel %vm280, %v250, 0
        %v369 = vsel %vm280, %v251, 0
        %v372 = vsel %vm280, %v252, 0
        %v375 = vsel %vm280, %v253, 0
        %vm377 = vcmask 1042432
        %v379 = vsel %vm377, %v266, 0
        %v382 = vsel %vm377, %v267, 0
        %v385 = vsel %vm377, %v268, 0
        %v388 = vsel %vm377, %v269, 0
        %390 = vmatpush.msra.mxu0 0.0
        %391 = vmatpush.msra.mxu0 0.0
        %392 = vmatpush.msra.mxu0 0.0
        %393 = vmatpush.msra.mxu0 0.0
        %394 = vmatpush.msra.mxu0 0.0
        %395 = vmatpush.msra.mxu0 0.0
        %396 = vmatpush.msra.mxu0 0.0
        %397 = vmatpush.msra.mxu0 0.0
        %398 = vmatpush.msra.mxu0 0.0
        %399 = vmatpush.msra.mxu0 0.0
        %400 = vmatpush.msra.mxu0 0.0
        %401 = vmatpush.msra.mxu0 0.0
        %402 = vmatpush.msra.mxu0 %v379
        %403 = vmatpush.msra.mxu0 %v262
        %404 = vmatpush.msra.mxu0 %v258
        %405 = vmatpush.msra.mxu0 %v254
        %406 = vmatmul.f32.gmra.mxu0 %v282
        %v407 = vpop.f32.mrf.mxu0
        %v408 = vadd.f32 %v272, %v407
        %409 = vmatmul.f32.gmra.mxu0 %v285
        %v410 = vpop.f32.mrf.mxu0
        %v411 = vadd.f32 %v272, %v410
        %412 = vmatmul.f32.gmra.mxu0 %v288
        %v413 = vpop.f32.mrf.mxu0
        %v414 = vadd.f32 %v272, %v413
        %415 = vmatmul.f32.gmra.mxu0 %v291
        %v416 = vpop.f32.mrf.mxu0
        %v417 = vadd.f32 %v272, %v416
        %418 = vmatmul.f32.gmra.mxu0 %v294
        %v419 = vpop.f32.mrf.mxu0
        %v420 = vadd.f32 %v272, %v419
        %421 = vmatmul.f32.gmra.mxu0 %v297
        %v422 = vpop.f32.mrf.mxu0
        %v423 = vadd.f32 %v272, %v422
        %424 = vmatmul.f32.gmra.mxu0 %v300
        %v425 = vpop.f32.mrf.mxu0
        %v426 = vadd.f32 %v272, %v425
        %427 = vmatmul.f32.gmra.mxu0 %v303
        %v428 = vpop.f32.mrf.mxu0
        %v429 = vadd.f32 %v272, %v428
        %430 = vmatmul.f32.gmra.mxu0 %v306
        %v431 = vpop.f32.mrf.mxu0
        %v432 = vadd.f32 %v272, %v431
        %433 = vmatmul.f32.gmra.mxu0 %v309
        %v434 = vpop.f32.mrf.mxu0
        %v435 = vadd.f32 %v272, %v434
        %436 = vmatmul.f32.gmra.mxu0 %v312
        %v437 = vpop.f32.mrf.mxu0
        %v438 = vadd.f32 %v272, %v437
        %439 = vmatmul.f32.gmra.mxu0 %v315
        %v440 = vpop.f32.mrf.mxu0
        %v441 = vadd.f32 %v272, %v440
        %442 = vmatmul.f32.gmra.mxu0 %v318
        %v443 = vpop.f32.mrf.mxu0
        %v444 = vadd.f32 %v272, %v443
        %445 = vmatmul.f32.gmra.mxu0 %v321
        %v446 = vpop.f32.mrf.mxu0
        %v447 = vadd.f32 %v272, %v446
        %448 = vmatmul.f32.gmra.mxu0 %v324
        %v449 = vpop.f32.mrf.mxu0
        %v450 = vadd.f32 %v272, %v449
        %451 = vmatmul.f32.gmra.mxu0 %v327
        %v452 = vpop.f32.mrf.mxu0
        %v453 = vadd.f32 %v272, %v452
        %454 = vmatmul.f32.gmra.mxu0 %v330
        %v455 = vpop.f32.mrf.mxu0
        %v456 = vadd.f32 %v272, %v455
        %457 = vmatmul.f32.gmra.mxu0 %v333
        %v458 = vpop.f32.mrf.mxu0
        %v459 = vadd.f32 %v272, %v458
        %460 = vmatmul.f32.gmra.mxu0 %v336
        %v461 = vpop.f32.mrf.mxu0
        %v462 = vadd.f32 %v272, %v461
        %463 = vmatmul.f32.gmra.mxu0 %v339
        %v464 = vpop.f32.mrf.mxu0
        %v465 = vadd.f32 %v272, %v464
        %466 = vmatmul.f32.gmra.mxu0 %v342
        %v467 = vpop.f32.mrf.mxu0
        %v468 = vadd.f32 %v272, %v467
        %469 = vmatmul.f32.gmra.mxu0 %v345
        %v470 = vpop.f32.mrf.mxu0
        %v471 = vadd.f32 %v272, %v470
        %472 = vmatmul.f32.gmra.mxu0 %v348
        %v473 = vpop.f32.mrf.mxu0
        %v474 = vadd.f32 %v272, %v473
        %475 = vmatmul.f32.gmra.mxu0 %v351
        %v476 = vpop.f32.mrf.mxu0
        %v477 = vadd.f32 %v272, %v476
        %478 = vmatmul.f32.gmra.mxu0 %v354
        %v479 = vpop.f32.mrf.mxu0
        %v480 = vadd.f32 %v272, %v479
        %481 = vmatmul.f32.gmra.mxu0 %v357
        %v482 = vpop.f32.mrf.mxu0
        %v483 = vadd.f32 %v272, %v482
        %484 = vmatmul.f32.gmra.mxu0 %v360
        %v485 = vpop.f32.mrf.mxu0
        %v486 = vadd.f32 %v272, %v485
        %487 = vmatmul.f32.gmra.mxu0 %v363
        %v488 = vpop.f32.mrf.mxu0
        %v489 = vadd.f32 %v272, %v488
        %490 = vmatmul.f32.gmra.mxu0 %v366
        %v491 = vpop.f32.mrf.mxu0
        %v492 = vadd.f32 %v272, %v491
        %493 = vmatmul.f32.gmra.mxu0 %v369
        %v494 = vpop.f32.mrf.mxu0
        %v495 = vadd.f32 %v272, %v494
        %496 = vmatmul.f32.gmra.mxu0 %v372
        %v497 = vpop.f32.mrf.mxu0
        %v498 = vadd.f32 %v272, %v497
        %499 = vmatmul.f32.gmra.mxu0 %v375
        %v500 = vpop.f32.mrf.mxu0
        %v501 = vadd.f32 %v272, %v500
        %502 = vdwg.mxu0
        %503 = vmatpush.msra.mxu0 0.0
        %504 = vmatpush.msra.mxu0 0.0
        %505 = vmatpush.msra.mxu0 0.0
        %506 = vmatpush.msra.mxu0 0.0
        %507 = vmatpush.msra.mxu0 0.0
        %508 = vmatpush.msra.mxu0 0.0
        %509 = vmatpush.msra.mxu0 0.0
        %510 = vmatpush.msra.mxu0 0.0
        %511 = vmatpush.msra.mxu0 0.0
        %512 = vmatpush.msra.mxu0 0.0
        %513 = vmatpush.msra.mxu0 0.0
        %514 = vmatpush.msra.mxu0 0.0
        %515 = vmatpush.msra.mxu0 %v382
        %516 = vmatpush.msra.mxu0 %v263
        %517 = vmatpush.msra.mxu0 %v259
        %518 = vmatpush.msra.mxu0 %v255
        %519 = vmatmul.f32.gmra.mxu0 %v282
        %v520 = vpop.f32.mrf.mxu0
        %v521 = vadd.f32 %v273, %v520
        %522 = vmatmul.f32.gmra.mxu0 %v285
        %v523 = vpop.f32.mrf.mxu0
        %v524 = vadd.f32 %v273, %v523
        %525 = vmatmul.f32.gmra.mxu0 %v288
        %v526 = vpop.f32.mrf.mxu0
        %v527 = vadd.f32 %v273, %v526
        %528 = vmatmul.f32.gmra.mxu0 %v291
        %v529 = vpop.f32.mrf.mxu0
        %v530 = vadd.f32 %v273, %v529
        %531 = vmatmul.f32.gmra.mxu0 %v294
        %v532 = vpop.f32.mrf.mxu0
        %v533 = vadd.f32 %v273, %v532
        %534 = vmatmul.f32.gmra.mxu0 %v297
        %v535 = vpop.f32.mrf.mxu0
        %v536 = vadd.f32 %v273, %v535
        %537 = vmatmul.f32.gmra.mxu0 %v300
        %v538 = vpop.f32.mrf.mxu0
        %v539 = vadd.f32 %v273, %v538
        %540 = vmatmul.f32.gmra.mxu0 %v303
        %v541 = vpop.f32.mrf.mxu0
        %v542 = vadd.f32 %v273, %v541
        %543 = vmatmul.f32.gmra.mxu0 %v306
        %v544 = vpop.f32.mrf.mxu0
        %v545 = vadd.f32 %v273, %v544
        %546 = vmatmul.f32.gmra.mxu0 %v309
        %v547 = vpop.f32.mrf.mxu0
        %v548 = vadd.f32 %v273, %v547
        %549 = vmatmul.f32.gmra.mxu0 %v312
        %v550 = vpop.f32.mrf.mxu0
        %v551 = vadd.f32 %v273, %v550
        %552 = vmatmul.f32.gmra.mxu0 %v315
        %v553 = vpop.f32.mrf.mxu0
        %v554 = vadd.f32 %v273, %v553
        %555 = vmatmul.f32.gmra.mxu0 %v318
        %v556 = vpop.f32.mrf.mxu0
        %v557 = vadd.f32 %v273, %v556
        %558 = vmatmul.f32.gmra.mxu0 %v321
        %v559 = vpop.f32.mrf.mxu0
        %v560 = vadd.f32 %v273, %v559
        %561 = vmatmul.f32.gmra.mxu0 %v324
        %v562 = vpop.f32.mrf.mxu0
        %v563 = vadd.f32 %v273, %v562
        %564 = vmatmul.f32.gmra.mxu0 %v327
        %v565 = vpop.f32.mrf.mxu0
        %v566 = vadd.f32 %v273, %v565
        %567 = vmatmul.f32.gmra.mxu0 %v330
        %v568 = vpop.f32.mrf.mxu0
        %v569 = vadd.f32 %v273, %v568
        %570 = vmatmul.f32.gmra.mxu0 %v333
        %v571 = vpop.f32.mrf.mxu0
        %v572 = vadd.f32 %v273, %v571
        %573 = vmatmul.f32.gmra.mxu0 %v336
        %v574 = vpop.f32.mrf.mxu0
        %v575 = vadd.f32 %v273, %v574
        %576 = vmatmul.f32.gmra.mxu0 %v339
        %v577 = vpop.f32.mrf.mxu0
        %v578 = vadd.f32 %v273, %v577
        %579 = vmatmul.f32.gmra.mxu0 %v342
        %v580 = vpop.f32.mrf.mxu0
        %v581 = vadd.f32 %v273, %v580
        %582 = vmatmul.f32.gmra.mxu0 %v345
        %v583 = vpop.f32.mrf.mxu0
        %v584 = vadd.f32 %v273, %v583
        %585 = vmatmul.f32.gmra.mxu0 %v348
        %v586 = vpop.f32.mrf.mxu0
        %v587 = vadd.f32 %v273, %v586
        %588 = vmatmul.f32.gmra.mxu0 %v351
        %v589 = vpop.f32.mrf.mxu0
        %v590 = vadd.f32 %v273, %v589
        %591 = vmatmul.f32.gmra.mxu0 %v354
        %v592 = vpop.f32.mrf.mxu0
        %v593 = vadd.f32 %v273, %v592
        %594 = vmatmul.f32.gmra.mxu0 %v357
        %v595 = vpop.f32.mrf.mxu0
        %v596 = vadd.f32 %v273, %v595
        %597 = vmatmul.f32.gmra.mxu0 %v360
        %v598 = vpop.f32.mrf.mxu0
        %v599 = vadd.f32 %v273, %v598
        %600 = vmatmul.f32.gmra.mxu0 %v363
        %v601 = vpop.f32.mrf.mxu0
        %v602 = vadd.f32 %v273, %v601
        %603 = vmatmul.f32.gmra.mxu0 %v366
        %v604 = vpop.f32.mrf.mxu0
        %v605 = vadd.f32 %v273, %v604
        %606 = vmatmul.f32.gmra.mxu0 %v369
        %v607 = vpop.f32.mrf.mxu0
        %v608 = vadd.f32 %v273, %v607
        %609 = vmatmul.f32.gmra.mxu0 %v372
        %v610 = vpop.f32.mrf.mxu0
        %v611 = vadd.f32 %v273, %v610
        %612 = vmatmul.f32.gmra.mxu0 %v375
        %v613 = vpop.f32.mrf.mxu0
        %v614 = vadd.f32 %v273, %v613
        %615 = vdwg.mxu0
        %616 = vmatpush.msra.mxu0 0.0
        %617 = vmatpush.msra.mxu0 0.0
        %618 = vmatpush.msra.mxu0 0.0
        %619 = vmatpush.msra.mxu0 0.0
        %620 = vmatpush.msra.mxu0 0.0
        %621 = vmatpush.msra.mxu0 0.0
        %622 = vmatpush.msra.mxu0 0.0
        %623 = vmatpush.msra.mxu0 0.0
        %624 = vmatpush.msra.mxu0 0.0
        %625 = vmatpush.msra.mxu0 0.0
        %626 = vmatpush.msra.mxu0 0.0
        %627 = vmatpush.msra.mxu0 0.0
        %628 = vmatpush.msra.mxu0 %v385
        %629 = vmatpush.msra.mxu0 %v264
        %630 = vmatpush.msra.mxu0 %v260
        %631 = vmatpush.msra.mxu0 %v256
        %632 = vmatmul.f32.gmra.mxu0 %v282
        %v633 = vpop.f32.mrf.mxu0
        %v634 = vadd.f32 %v274, %v633
        %635 = vmatmul.f32.gmra.mxu0 %v285
        %v636 = vpop.f32.mrf.mxu0
        %v637 = vadd.f32 %v274, %v636
        %638 = vmatmul.f32.gmra.mxu0 %v288
        %v639 = vpop.f32.mrf.mxu0
        %v640 = vadd.f32 %v274, %v639
        %641 = vmatmul.f32.gmra.mxu0 %v291
        %v642 = vpop.f32.mrf.mxu0
        %v643 = vadd.f32 %v274, %v642
        %644 = vmatmul.f32.gmra.mxu0 %v294
        %v645 = vpop.f32.mrf.mxu0
        %v646 = vadd.f32 %v274, %v645
        %647 = vmatmul.f32.gmra.mxu0 %v297
        %v648 = vpop.f32.mrf.mxu0
        %v649 = vadd.f32 %v274, %v648
        %650 = vmatmul.f32.gmra.mxu0 %v300
        %v651 = vpop.f32.mrf.mxu0
        %v652 = vadd.f32 %v274, %v651
        %653 = vmatmul.f32.gmra.mxu0 %v303
        %v654 = vpop.f32.mrf.mxu0
        %v655 = vadd.f32 %v274, %v654
        %656 = vmatmul.f32.gmra.mxu0 %v306
        %v657 = vpop.f32.mrf.mxu0
        %v658 = vadd.f32 %v274, %v657
        %659 = vmatmul.f32.gmra.mxu0 %v309
        %v660 = vpop.f32.mrf.mxu0
        %v661 = vadd.f32 %v274, %v660
        %662 = vmatmul.f32.gmra.mxu0 %v312
        %v663 = vpop.f32.mrf.mxu0
        %v664 = vadd.f32 %v274, %v663
        %665 = vmatmul.f32.gmra.mxu0 %v315
        %v666 = vpop.f32.mrf.mxu0
        %v667 = vadd.f32 %v274, %v666
        %668 = vmatmul.f32.gmra.mxu0 %v318
        %v669 = vpop.f32.mrf.mxu0
        %v670 = vadd.f32 %v274, %v669
        %671 = vmatmul.f32.gmra.mxu0 %v321
        %v672 = vpop.f32.mrf.mxu0
        %v673 = vadd.f32 %v274, %v672
        %674 = vmatmul.f32.gmra.mxu0 %v324
        %v675 = vpop.f32.mrf.mxu0
        %v676 = vadd.f32 %v274, %v675
        %677 = vmatmul.f32.gmra.mxu0 %v327
        %v678 = vpop.f32.mrf.mxu0
        %v679 = vadd.f32 %v274, %v678
        %680 = vmatmul.f32.gmra.mxu0 %v330
        %v681 = vpop.f32.mrf.mxu0
        %v682 = vadd.f32 %v274, %v681
        %683 = vmatmul.f32.gmra.mxu0 %v333
        %v684 = vpop.f32.mrf.mxu0
        %v685 = vadd.f32 %v274, %v684
        %686 = vmatmul.f32.gmra.mxu0 %v336
        %v687 = vpop.f32.mrf.mxu0
        %v688 = vadd.f32 %v274, %v687
        %689 = vmatmul.f32.gmra.mxu0 %v339
        %v690 = vpop.f32.mrf.mxu0
        %v691 = vadd.f32 %v274, %v690
        %692 = vmatmul.f32.gmra.mxu0 %v342
        %v693 = vpop.f32.mrf.mxu0
        %v694 = vadd.f32 %v274, %v693
        %695 = vmatmul.f32.gmra.mxu0 %v345
        %v696 = vpop.f32.mrf.mxu0
        %v697 = vadd.f32 %v274, %v696
        %698 = vmatmul.f32.gmra.mxu0 %v348
        %v699 = vpop.f32.mrf.mxu0
        %v700 = vadd.f32 %v274, %v699
        %701 = vmatmul.f32.gmra.mxu0 %v351
        %v702 = vpop.f32.mrf.mxu0
        %v703 = vadd.f32 %v274, %v702
        %704 = vmatmul.f32.gmra.mxu0 %v354
        %v705 = vpop.f32.mrf.mxu0
        %v706 = vadd.f32 %v274, %v705
        %707 = vmatmul.f32.gmra.mxu0 %v357
        %v708 = vpop.f32.mrf.mxu0
        %v709 = vadd.f32 %v274, %v708
        %710 = vmatmul.f32.gmra.mxu0 %v360
        %v711 = vpop.f32.mrf.mxu0
        %v712 = vadd.f32 %v274, %v711
        %713 = vmatmul.f32.gmra.mxu0 %v363
        %v714 = vpop.f32.mrf.mxu0
        %v715 = vadd.f32 %v274, %v714
        %716 = vmatmul.f32.gmra.mxu0 %v366
        %v717 = vpop.f32.mrf.mxu0
        %v718 = vadd.f32 %v274, %v717
        %719 = vmatmul.f32.gmra.mxu0 %v369
        %v720 = vpop.f32.mrf.mxu0
        %v721 = vadd.f32 %v274, %v720
        %722 = vmatmul.f32.gmra.mxu0 %v372
        %v723 = vpop.f32.mrf.mxu0
        %v724 = vadd.f32 %v274, %v723
        %725 = vmatmul.f32.gmra.mxu0 %v375
        %v726 = vpop.f32.mrf.mxu0
        %v727 = vadd.f32 %v274, %v726
        %728 = vdwg.mxu0
        %729 = vmatpush.msra.mxu0 0.0
        %730 = vmatpush.msra.mxu0 0.0
        %731 = vmatpush.msra.mxu0 0.0
        %732 = vmatpush.msra.mxu0 0.0
        %733 = vmatpush.msra.mxu0 0.0
        %734 = vmatpush.msra.mxu0 0.0
        %735 = vmatpush.msra.mxu0 0.0
        %736 = vmatpush.msra.mxu0 0.0
        %737 = vmatpush.msra.mxu0 0.0
        %738 = vmatpush.msra.mxu0 0.0
        %739 = vmatpush.msra.mxu0 0.0
        %740 = vmatpush.msra.mxu0 0.0
        %741 = vmatpush.msra.mxu0 %v388
        %742 = vmatpush.msra.mxu0 %v265
        %743 = vmatpush.msra.mxu0 %v261
        %744 = vmatpush.msra.mxu0 %v257
        %745 = vmatmul.f32.gmra.mxu0 %v282
        %v746 = vpop.f32.mrf.mxu0
        %v747 = vadd.f32 %v275, %v746
        %748 = vmatmul.f32.gmra.mxu0 %v285
        %v749 = vpop.f32.mrf.mxu0
        %v750 = vadd.f32 %v275, %v749
        %751 = vmatmul.f32.gmra.mxu0 %v288
        %v752 = vpop.f32.mrf.mxu0
        %v753 = vadd.f32 %v275, %v752
        %754 = vmatmul.f32.gmra.mxu0 %v291
        %v755 = vpop.f32.mrf.mxu0
        %v756 = vadd.f32 %v275, %v755
        %757 = vmatmul.f32.gmra.mxu0 %v294
        %v758 = vpop.f32.mrf.mxu0
        %v759 = vadd.f32 %v275, %v758
        %760 = vmatmul.f32.gmra.mxu0 %v297
        %v761 = vpop.f32.mrf.mxu0
        %v762 = vadd.f32 %v275, %v761
        %763 = vmatmul.f32.gmra.mxu0 %v300
        %v764 = vpop.f32.mrf.mxu0
        %v765 = vadd.f32 %v275, %v764
        %766 = vmatmul.f32.gmra.mxu0 %v303
        %v767 = vpop.f32.mrf.mxu0
        %v768 = vadd.f32 %v275, %v767
        %769 = vmatmul.f32.gmra.mxu0 %v306
        %v770 = vpop.f32.mrf.mxu0
        %v771 = vadd.f32 %v275, %v770
        %772 = vmatmul.f32.gmra.mxu0 %v309
        %v773 = vpop.f32.mrf.mxu0
        %v774 = vadd.f32 %v275, %v773
        %775 = vmatmul.f32.gmra.mxu0 %v312
        %v776 = vpop.f32.mrf.mxu0
        %v777 = vadd.f32 %v275, %v776
        %778 = vmatmul.f32.gmra.mxu0 %v315
        %v779 = vpop.f32.mrf.mxu0
        %v780 = vadd.f32 %v275, %v779
        %781 = vmatmul.f32.gmra.mxu0 %v318
        %v782 = vpop.f32.mrf.mxu0
        %v783 = vadd.f32 %v275, %v782
        %784 = vmatmul.f32.gmra.mxu0 %v321
        %v785 = vpop.f32.mrf.mxu0
        %v786 = vadd.f32 %v275, %v785
        %787 = vmatmul.f32.gmra.mxu0 %v324
        %v788 = vpop.f32.mrf.mxu0
        %v789 = vadd.f32 %v275, %v788
        %790 = vmatmul.f32.gmra.mxu0 %v327
        %v791 = vpop.f32.mrf.mxu0
        %v792 = vadd.f32 %v275, %v791
        %793 = vmatmul.f32.gmra.mxu0 %v330
        %v794 = vpop.f32.mrf.mxu0
        %v795 = vadd.f32 %v275, %v794
        %796 = vmatmul.f32.gmra.mxu0 %v333
        %v797 = vpop.f32.mrf.mxu0
        %v798 = vadd.f32 %v275, %v797
        %799 = vmatmul.f32.gmra.mxu0 %v336
        %v800 = vpop.f32.mrf.mxu0
        %v801 = vadd.f32 %v275, %v800
        %802 = vmatmul.f32.gmra.mxu0 %v339
        %v803 = vpop.f32.mrf.mxu0
        %v804 = vadd.f32 %v275, %v803
        %805 = vmatmul.f32.gmra.mxu0 %v342
        %v806 = vpop.f32.mrf.mxu0
        %v807 = vadd.f32 %v275, %v806
        %808 = vmatmul.f32.gmra.mxu0 %v345
        %v809 = vpop.f32.mrf.mxu0
        %v810 = vadd.f32 %v275, %v809
        %811 = vmatmul.f32.gmra.mxu0 %v348
        %v812 = vpop.f32.mrf.mxu0
        %v813 = vadd.f32 %v275, %v812
        %814 = vmatmul.f32.gmra.mxu0 %v351
        %v815 = vpop.f32.mrf.mxu0
        %v816 = vadd.f32 %v275, %v815
        %817 = vmatmul.f32.gmra.mxu0 %v354
        %v818 = vpop.f32.mrf.mxu0
        %v819 = vadd.f32 %v275, %v818
        %820 = vmatmul.f32.gmra.mxu0 %v357
        %v821 = vpop.f32.mrf.mxu0
        %v822 = vadd.f32 %v275, %v821
        %823 = vmatmul.f32.gmra.mxu0 %v360
        %v824 = vpop.f32.mrf.mxu0
        %v825 = vadd.f32 %v275, %v824
        %826 = vmatmul.f32.gmra.mxu0 %v363
        %v827 = vpop.f32.mrf.mxu0
        %v828 = vadd.f32 %v275, %v827
        %829 = vmatmul.f32.gmra.mxu0 %v366
        %v830 = vpop.f32.mrf.mxu0
        %v831 = vadd.f32 %v275, %v830
        %832 = vmatmul.f32.gmra.mxu0 %v369
        %v833 = vpop.f32.mrf.mxu0
        %v834 = vadd.f32 %v275, %v833
        %835 = vmatmul.f32.gmra.mxu0 %v372
        %v836 = vpop.f32.mrf.mxu0
        %v837 = vadd.f32 %v275, %v836
        %838 = vmatmul.f32.gmra.mxu0 %v375
        %v839 = vpop.f32.mrf.mxu0
        %v840 = vadd.f32 %v275, %v839
        %841 = vdwg.mxu0
        %v842 = vmax.f32 %v408, 0.0
        %v843 = vmax.f32 %v521, 0.0
        %v844 = vmax.f32 %v634, 0.0
        %v845 = vmax.f32 %v747, 0.0
        %v846 = vmax.f32 %v411, 0.0
        %v847 = vmax.f32 %v524, 0.0
        %v848 = vmax.f32 %v637, 0.0
        %v849 = vmax.f32 %v750, 0.0
        %v850 = vmax.f32 %v414, 0.0
        %v851 = vmax.f32 %v527, 0.0
        %v852 = vmax.f32 %v640, 0.0
        %v853 = vmax.f32 %v753, 0.0
        %v854 = vmax.f32 %v417, 0.0
        %v855 = vmax.f32 %v530, 0.0
        %v856 = vmax.f32 %v643, 0.0
        %v857 = vmax.f32 %v756, 0.0
        %v858 = vmax.f32 %v420, 0.0
        %v859 = vmax.f32 %v533, 0.0
        %v860 = vmax.f32 %v646, 0.0
        %v861 = vmax.f32 %v759, 0.0
        %v862 = vmax.f32 %v423, 0.0
        %v863 = vmax.f32 %v536, 0.0
        %v864 = vmax.f32 %v649, 0.0
        %v865 = vmax.f32 %v762, 0.0
        %v866 = vmax.f32 %v426, 0.0
        %v867 = vmax.f32 %v539, 0.0
        %v868 = vmax.f32 %v652, 0.0
        %v869 = vmax.f32 %v765, 0.0
        %v870 = vmax.f32 %v429, 0.0
        %v871 = vmax.f32 %v542, 0.0
        %v872 = vmax.f32 %v655, 0.0
        %v873 = vmax.f32 %v768, 0.0
        %v874 = vmax.f32 %v432, 0.0
        %v875 = vmax.f32 %v545, 0.0
        %v876 = vmax.f32 %v658, 0.0
        %v877 = vmax.f32 %v771, 0.0
        %v878 = vmax.f32 %v435, 0.0
        %v879 = vmax.f32 %v548, 0.0
        %v880 = vmax.f32 %v661, 0.0
        %v881 = vmax.f32 %v774, 0.0
        %v882 = vmax.f32 %v438, 0.0
        %v883 = vmax.f32 %v551, 0.0
        %v884 = vmax.f32 %v664, 0.0
        %v885 = vmax.f32 %v777, 0.0
        %v886 = vmax.f32 %v441, 0.0
        %v887 = vmax.f32 %v554, 0.0
        %v888 = vmax.f32 %v667, 0.0
        %v889 = vmax.f32 %v780, 0.0
        %v890 = vmax.f32 %v444, 0.0
        %v891 = vmax.f32 %v557, 0.0
        %v892 = vmax.f32 %v670, 0.0
        %v893 = vmax.f32 %v783, 0.0
        %v894 = vmax.f32 %v447, 0.0
        %v895 = vmax.f32 %v560, 0.0
        %v896 = vmax.f32 %v673, 0.0
        %v897 = vmax.f32 %v786, 0.0
        %v898 = vmax.f32 %v450, 0.0
        %v899 = vmax.f32 %v563, 0.0
        %v900 = vmax.f32 %v676, 0.0
        %v901 = vmax.f32 %v789, 0.0
        %v902 = vmax.f32 %v453, 0.0
        %v903 = vmax.f32 %v566, 0.0
        %v904 = vmax.f32 %v679, 0.0
        %v905 = vmax.f32 %v792, 0.0
        %v906 = vmax.f32 %v456, 0.0
        %v907 = vmax.f32 %v569, 0.0
        %v908 = vmax.f32 %v682, 0.0
        %v909 = vmax.f32 %v795, 0.0
        %v910 = vmax.f32 %v459, 0.0
        %v911 = vmax.f32 %v572, 0.0
        %v912 = vmax.f32 %v685, 0.0
        %v913 = vmax.f32 %v798, 0.0
        %v914 = vmax.f32 %v462, 0.0
        %v915 = vmax.f32 %v575, 0.0
        %v916 = vmax.f32 %v688, 0.0
        %v917 = vmax.f32 %v801, 0.0
        %v918 = vmax.f32 %v465, 0.0
        %v919 = vmax.f32 %v578, 0.0
        %v920 = vmax.f32 %v691, 0.0
        %v921 = vmax.f32 %v804, 0.0
        %v922 = vmax.f32 %v468, 0.0
        %v923 = vmax.f32 %v581, 0.0
        %v924 = vmax.f32 %v694, 0.0
        %v925 = vmax.f32 %v807, 0.0
        %v926 = vmax.f32 %v471, 0.0
        %v927 = vmax.f32 %v584, 0.0
        %v928 = vmax.f32 %v697, 0.0
        %v929 = vmax.f32 %v810, 0.0
        %v930 = vmax.f32 %v474, 0.0
        %v931 = vmax.f32 %v587, 0.0
        %v932 = vmax.f32 %v700, 0.0
        %v933 = vmax.f32 %v813, 0.0
        %v934 = vmax.f32 %v477, 0.0
        %v935 = vmax.f32 %v590, 0.0
        %v936 = vmax.f32 %v703, 0.0
        %v937 = vmax.f32 %v816, 0.0
        %v938 = vmax.f32 %v480, 0.0
        %v939 = vmax.f32 %v593, 0.0
        %v940 = vmax.f32 %v706, 0.0
        %v941 = vmax.f32 %v819, 0.0
        %v942 = vmax.f32 %v483, 0.0
        %v943 = vmax.f32 %v596, 0.0
        %v944 = vmax.f32 %v709, 0.0
        %v945 = vmax.f32 %v822, 0.0
        %v946 = vmax.f32 %v486, 0.0
        %v947 = vmax.f32 %v599, 0.0
        %v948 = vmax.f32 %v712, 0.0
        %v949 = vmax.f32 %v825, 0.0
        %v950 = vmax.f32 %v489, 0.0
        %v951 = vmax.f32 %v602, 0.0
        %v952 = vmax.f32 %v715, 0.0
        %v953 = vmax.f32 %v828, 0.0
        %v954 = vmax.f32 %v492, 0.0
        %v955 = vmax.f32 %v605, 0.0
        %v956 = vmax.f32 %v718, 0.0
        %v957 = vmax.f32 %v831, 0.0
        %v958 = vmax.f32 %v495, 0.0
        %v959 = vmax.f32 %v608, 0.0
        %v960 = vmax.f32 %v721, 0.0
        %v961 = vmax.f32 %v834, 0.0
        %v962 = vmax.f32 %v498, 0.0
        %v963 = vmax.f32 %v611, 0.0
        %v964 = vmax.f32 %v724, 0.0
        %v965 = vmax.f32 %v837, 0.0
        %v966 = vmax.f32 %v501, 0.0
        %v967 = vmax.f32 %v614, 0.0
        %v968 = vmax.f32 %v727, 0.0
        %v969 = vmax.f32 %v840, 0.0
        %v1098 = vrot.slane %v843, 6
        %v1099 = vrot.slane %v844, 4
        %v1100 = vrot.slane %v845, 2
        %v1101 = vrot.slane %v847, 6
        %v1102 = vrot.slane %v848, 4
        %v1103 = vrot.slane %v849, 2
        %v1104 = vrot.slane %v851, 6
        %v1105 = vrot.slane %v852, 4
        %v1106 = vrot.slane %v853, 2
        %v1107 = vrot.slane %v855, 6
        %v1108 = vrot.slane %v856, 4
        %v1109 = vrot.slane %v857, 2
        %v1110 = vrot.slane %v859, 6
        %v1111 = vrot.slane %v860, 4
        %v1112 = vrot.slane %v861, 2
        %v1113 = vrot.slane %v863, 6
        %v1114 = vrot.slane %v864, 4
        %v1115 = vrot.slane %v865, 2
        %v1116 = vrot.slane %v867, 6
        %v1117 = vrot.slane %v868, 4
        %v1118 = vrot.slane %v869, 2
        %v1119 = vrot.slane %v871, 6
        %v1120 = vrot.slane %v872, 4
        %v1121 = vrot.slane %v873, 2
        %v1122 = vrot.slane %v875, 6
        %v1123 = vrot.slane %v876, 4
        %v1124 = vrot.slane %v877, 2
        %v1125 = vrot.slane %v879, 6
        %v1126 = vrot.slane %v880, 4
        %v1127 = vrot.slane %v881, 2
        %v1128 = vrot.slane %v883, 6
        %v1129 = vrot.slane %v884, 4
        %v1130 = vrot.slane %v885, 2
        %v1131 = vrot.slane %v887, 6
        %v1132 = vrot.slane %v888, 4
        %v1133 = vrot.slane %v889, 2
        %v1134 = vrot.slane %v891, 6
        %v1135 = vrot.slane %v892, 4
        %v1136 = vrot.slane %v893, 2
        %v1137 = vrot.slane %v895, 6
        %v1138 = vrot.slane %v896, 4
        %v1139 = vrot.slane %v897, 2
        %v1140 = vrot.slane %v899, 6
        %v1141 = vrot.slane %v900, 4
        %v1142 = vrot.slane %v901, 2
        %v1143 = vrot.slane %v903, 6
        %v1144 = vrot.slane %v904, 4
        %v1145 = vrot.slane %v905, 2
        %v1146 = vrot.slane %v907, 6
        %v1147 = vrot.slane %v908, 4
        %v1148 = vrot.slane %v909, 2
        %v1149 = vrot.slane %v911, 6
        %v1150 = vrot.slane %v912, 4
        %v1151 = vrot.slane %v913, 2
        %v1152 = vrot.slane %v915, 6
        %v1153 = vrot.slane %v916, 4
        %v1154 = vrot.slane %v917, 2
        %v1155 = vrot.slane %v919, 6
        %v1156 = vrot.slane %v920, 4
        %v1157 = vrot.slane %v921, 2
        %v1158 = vrot.slane %v923, 6
        %v1159 = vrot.slane %v924, 4
        %v1160 = vrot.slane %v925, 2
        %v1161 = vrot.slane %v927, 6
        %v1162 = vrot.slane %v928, 4
        %v1163 = vrot.slane %v929, 2
        %v1164 = vrot.slane %v931, 6
        %v1165 = vrot.slane %v932, 4
        %v1166 = vrot.slane %v933, 2
        %v1167 = vrot.slane %v935, 6
        %v1168 = vrot.slane %v936, 4
        %v1169 = vrot.slane %v937, 2
        %v1170 = vrot.slane %v939, 6
        %v1171 = vrot.slane %v940, 4
        %v1172 = vrot.slane %v941, 2
        %v1173 = vrot.slane %v943, 6
        %v1174 = vrot.slane %v944, 4
        %v1175 = vrot.slane %v945, 2
        %v1176 = vrot.slane %v947, 6
        %v1177 = vrot.slane %v948, 4
        %v1178 = vrot.slane %v949, 2
        %v1179 = vrot.slane %v951, 6
        %v1180 = vrot.slane %v952, 4
        %v1181 = vrot.slane %v953, 2
        %v1182 = vrot.slane %v955, 6
        %v1183 = vrot.slane %v956, 4
        %v1184 = vrot.slane %v957, 2
        %v1185 = vrot.slane %v959, 6
        %v1186 = vrot.slane %v960, 4
        %v1187 = vrot.slane %v961, 2
        %v1188 = vrot.slane %v963, 6
        %v1189 = vrot.slane %v964, 4
        %v1190 = vrot.slane %v965, 2
        %v1191 = vrot.slane %v967, 6
        %v1192 = vrot.slane %v968, 4
        %v1193 = vrot.slane %v969, 2
        %vm1194 = vcmask 1041408
        %v1195 = vsel %vm1194, %v842, %v1098
        %vm1196 = vcmask 1045508
        %v1197 = vsel %vm1196, %v1099, %v1100
        %vm1198 = vcmask 1043456
        %v1199 = vsel %vm1198, %v1195, %v1197
        %vm1200 = vcmask 1043458
        %v1201 = vsel %vm1200, %v842, %v1098
        %vm1202 = vcmask 1045504
        %v1203 = vsel %vm1202, %v1100, %v1099
        %vm1204 = vcmask 1045506
        %v1205 = vsel %vm1204, %v1201, %v1203
        %v1206 = vrot.slane %v1205, 2
        %v1207 = vsel %vm1196, %v842, %v1098
        %v1208 = vsel %vm1194, %v1099, %v1100
        %v1209 = vsel %vm1198, %v1208, %v1207
        %v1210 = vrot.slane %v1209, 4
        %v1211 = vsel %vm1202, %v1098, %v842
        %v1212 = vsel %vm1200, %v1099, %v1100
        %v1213 = vsel %vm1204, %v1212, %v1211
        %v1214 = vrot.slane %v1213, 6
        %v1215 = vsel %vm1194, %v846, %v1101
        %v1216 = vsel %vm1196, %v1102, %v1103
        %v1217 = vsel %vm1198, %v1215, %v1216
        %v1218 = vsel %vm1200, %v846, %v1101
        %v1219 = vsel %vm1202, %v1103, %v1102
        %v1220 = vsel %vm1204, %v1218, %v1219
        %v1221 = vrot.slane %v1220, 2
        %v1222 = vsel %vm1196, %v846, %v1101
        %v1223 = vsel %vm1194, %v1102, %v1103
        %v1224 = vsel %vm1198, %v1223, %v1222
        %v1225 = vrot.slane %v1224, 4
        %v1226 = vsel %vm1202, %v1101, %v846
        %v1227 = vsel %vm1200, %v1102, %v1103
        %v1228 = vsel %vm1204, %v1227, %v1226
        %v1229 = vrot.slane %v1228, 6
        %v1230 = vsel %vm1194, %v850, %v1104
        %v1231 = vsel %vm1196, %v1105, %v1106
        %v1232 = vsel %vm1198, %v1230, %v1231
        %v1233 = vsel %vm1200, %v850, %v1104
        %v1234 = vsel %vm1202, %v1106, %v1105
        %v1235 = vsel %vm1204, %v1233, %v1234
        %v1236 = vrot.slane %v1235, 2
        %v1237 = vsel %vm1196, %v850, %v1104
        %v1238 = vsel %vm1194, %v1105, %v1106
        %v1239 = vsel %vm1198, %v1238, %v1237
        %v1240 = vrot.slane %v1239, 4
        %v1241 = vsel %vm1202, %v1104, %v850
        %v1242 = vsel %vm1200, %v1105, %v1106
        %v1243 = vsel %vm1204, %v1242, %v1241
        %v1244 = vrot.slane %v1243, 6
        %v1245 = vsel %vm1194, %v854, %v1107
        %v1246 = vsel %vm1196, %v1108, %v1109
        %v1247 = vsel %vm1198, %v1245, %v1246
        %v1248 = vsel %vm1200, %v854, %v1107
        %v1249 = vsel %vm1202, %v1109, %v1108
        %v1250 = vsel %vm1204, %v1248, %v1249
        %v1251 = vrot.slane %v1250, 2
        %v1252 = vsel %vm1196, %v854, %v1107
        %v1253 = vsel %vm1194, %v1108, %v1109
        %v1254 = vsel %vm1198, %v1253, %v1252
        %v1255 = vrot.slane %v1254, 4
        %v1256 = vsel %vm1202, %v1107, %v854
        %v1257 = vsel %vm1200, %v1108, %v1109
        %v1258 = vsel %vm1204, %v1257, %v1256
        %v1259 = vrot.slane %v1258, 6
        %v1260 = vsel %vm1194, %v858, %v1110
        %v1261 = vsel %vm1196, %v1111, %v1112
        %v1262 = vsel %vm1198, %v1260, %v1261
        %v1263 = vsel %vm1200, %v858, %v1110
        %v1264 = vsel %vm1202, %v1112, %v1111
        %v1265 = vsel %vm1204, %v1263, %v1264
        %v1266 = vrot.slane %v1265, 2
        %v1267 = vsel %vm1196, %v858, %v1110
        %v1268 = vsel %vm1194, %v1111, %v1112
        %v1269 = vsel %vm1198, %v1268, %v1267
        %v1270 = vrot.slane %v1269, 4
        %v1271 = vsel %vm1202, %v1110, %v858
        %v1272 = vsel %vm1200, %v1111, %v1112
        %v1273 = vsel %vm1204, %v1272, %v1271
        %v1274 = vrot.slane %v1273, 6
        %v1275 = vsel %vm1194, %v862, %v1113
        %v1276 = vsel %vm1196, %v1114, %v1115
        %v1277 = vsel %vm1198, %v1275, %v1276
        %v1278 = vsel %vm1200, %v862, %v1113
        %v1279 = vsel %vm1202, %v1115, %v1114
        %v1280 = vsel %vm1204, %v1278, %v1279
        %v1281 = vrot.slane %v1280, 2
        %v1282 = vsel %vm1196, %v862, %v1113
        %v1283 = vsel %vm1194, %v1114, %v1115
        %v1284 = vsel %vm1198, %v1283, %v1282
        %v1285 = vrot.slane %v1284, 4
        %v1286 = vsel %vm1202, %v1113, %v862
        %v1287 = vsel %vm1200, %v1114, %v1115
        %v1288 = vsel %vm1204, %v1287, %v1286
        %v1289 = vrot.slane %v1288, 6
        %v1290 = vsel %vm1194, %v866, %v1116
        %v1291 = vsel %vm1196, %v1117, %v1118
        %v1292 = vsel %vm1198, %v1290, %v1291
        %v1293 = vsel %vm1200, %v866, %v1116
        %v1294 = vsel %vm1202, %v1118, %v1117
        %v1295 = vsel %vm1204, %v1293, %v1294
        %v1296 = vrot.slane %v1295, 2
        %v1297 = vsel %vm1196, %v866, %v1116
        %v1298 = vsel %vm1194, %v1117, %v1118
        %v1299 = vsel %vm1198, %v1298, %v1297
        %v1300 = vrot.slane %v1299, 4
        %v1301 = vsel %vm1202, %v1116, %v866
        %v1302 = vsel %vm1200, %v1117, %v1118
        %v1303 = vsel %vm1204, %v1302, %v1301
        %v1304 = vrot.slane %v1303, 6
        %v1305 = vsel %vm1194, %v870, %v1119
        %v1306 = vsel %vm1196, %v1120, %v1121
        %v1307 = vsel %vm1198, %v1305, %v1306
        %v1308 = vsel %vm1200, %v870, %v1119
        %v1309 = vsel %vm1202, %v1121, %v1120
        %v1310 = vsel %vm1204, %v1308, %v1309
        %v1311 = vrot.slane %v1310, 2
        %v1312 = vsel %vm1196, %v870, %v1119
        %v1313 = vsel %vm1194, %v1120, %v1121
        %v1314 = vsel %vm1198, %v1313, %v1312
        %v1315 = vrot.slane %v1314, 4
        %v1316 = vsel %vm1202, %v1119, %v870
        %v1317 = vsel %vm1200, %v1120, %v1121
        %v1318 = vsel %vm1204, %v1317, %v1316
        %v1319 = vrot.slane %v1318, 6
        %v1320 = vsel %vm1194, %v874, %v1122
        %v1321 = vsel %vm1196, %v1123, %v1124
        %v1322 = vsel %vm1198, %v1320, %v1321
        %v1323 = vsel %vm1200, %v874, %v1122
        %v1324 = vsel %vm1202, %v1124, %v1123
        %v1325 = vsel %vm1204, %v1323, %v1324
        %v1326 = vrot.slane %v1325, 2
        %v1327 = vsel %vm1196, %v874, %v1122
        %v1328 = vsel %vm1194, %v1123, %v1124
        %v1329 = vsel %vm1198, %v1328, %v1327
        %v1330 = vrot.slane %v1329, 4
        %v1331 = vsel %vm1202, %v1122, %v874
        %v1332 = vsel %vm1200, %v1123, %v1124
        %v1333 = vsel %vm1204, %v1332, %v1331
        %v1334 = vrot.slane %v1333, 6
        %v1335 = vsel %vm1194, %v878, %v1125
        %v1336 = vsel %vm1196, %v1126, %v1127
        %v1337 = vsel %vm1198, %v1335, %v1336
        %v1338 = vsel %vm1200, %v878, %v1125
        %v1339 = vsel %vm1202, %v1127, %v1126
        %v1340 = vsel %vm1204, %v1338, %v1339
        %v1341 = vrot.slane %v1340, 2
        %v1342 = vsel %vm1196, %v878, %v1125
        %v1343 = vsel %vm1194, %v1126, %v1127
        %v1344 = vsel %vm1198, %v1343, %v1342
        %v1345 = vrot.slane %v1344, 4
        %v1346 = vsel %vm1202, %v1125, %v878
        %v1347 = vsel %vm1200, %v1126, %v1127
        %v1348 = vsel %vm1204, %v1347, %v1346
        %v1349 = vrot.slane %v1348, 6
        %v1350 = vsel %vm1194, %v882, %v1128
        %v1351 = vsel %vm1196, %v1129, %v1130
        %v1352 = vsel %vm1198, %v1350, %v1351
        %v1353 = vsel %vm1200, %v882, %v1128
        %v1354 = vsel %vm1202, %v1130, %v1129
        %v1355 = vsel %vm1204, %v1353, %v1354
        %v1356 = vrot.slane %v1355, 2
        %v1357 = vsel %vm1196, %v882, %v1128
        %v1358 = vsel %vm1194, %v1129, %v1130
        %v1359 = vsel %vm1198, %v1358, %v1357
        %v1360 = vrot.slane %v1359, 4
        %v1361 = vsel %vm1202, %v1128, %v882
        %v1362 = vsel %vm1200, %v1129, %v1130
        %v1363 = vsel %vm1204, %v1362, %v1361
        %v1364 = vrot.slane %v1363, 6
        %v1365 = vsel %vm1194, %v886, %v1131
        %v1366 = vsel %vm1196, %v1132, %v1133
        %v1367 = vsel %vm1198, %v1365, %v1366
        %v1368 = vsel %vm1200, %v886, %v1131
        %v1369 = vsel %vm1202, %v1133, %v1132
        %v1370 = vsel %vm1204, %v1368, %v1369
        %v1371 = vrot.slane %v1370, 2
        %v1372 = vsel %vm1196, %v886, %v1131
        %v1373 = vsel %vm1194, %v1132, %v1133
        %v1374 = vsel %vm1198, %v1373, %v1372
        %v1375 = vrot.slane %v1374, 4
        %v1376 = vsel %vm1202, %v1131, %v886
        %v1377 = vsel %vm1200, %v1132, %v1133
        %v1378 = vsel %vm1204, %v1377, %v1376
        %v1379 = vrot.slane %v1378, 6
        %v1380 = vsel %vm1194, %v890, %v1134
        %v1381 = vsel %vm1196, %v1135, %v1136
        %v1382 = vsel %vm1198, %v1380, %v1381
        %v1383 = vsel %vm1200, %v890, %v1134
        %v1384 = vsel %vm1202, %v1136, %v1135
        %v1385 = vsel %vm1204, %v1383, %v1384
        %v1386 = vrot.slane %v1385, 2
        %v1387 = vsel %vm1196, %v890, %v1134
        %v1388 = vsel %vm1194, %v1135, %v1136
        %v1389 = vsel %vm1198, %v1388, %v1387
        %v1390 = vrot.slane %v1389, 4
        %v1391 = vsel %vm1202, %v1134, %v890
        %v1392 = vsel %vm1200, %v1135, %v1136
        %v1393 = vsel %vm1204, %v1392, %v1391
        %v1394 = vrot.slane %v1393, 6
        %v1395 = vsel %vm1194, %v894, %v1137
        %v1396 = vsel %vm1196, %v1138, %v1139
        %v1397 = vsel %vm1198, %v1395, %v1396
        %v1398 = vsel %vm1200, %v894, %v1137
        %v1399 = vsel %vm1202, %v1139, %v1138
        %v1400 = vsel %vm1204, %v1398, %v1399
        %v1401 = vrot.slane %v1400, 2
        %v1402 = vsel %vm1196, %v894, %v1137
        %v1403 = vsel %vm1194, %v1138, %v1139
        %v1404 = vsel %vm1198, %v1403, %v1402
        %v1405 = vrot.slane %v1404, 4
        %v1406 = vsel %vm1202, %v1137, %v894
        %v1407 = vsel %vm1200, %v1138, %v1139
        %v1408 = vsel %vm1204, %v1407, %v1406
        %v1409 = vrot.slane %v1408, 6
        %v1410 = vsel %vm1194, %v898, %v1140
        %v1411 = vsel %vm1196, %v1141, %v1142
        %v1412 = vsel %vm1198, %v1410, %v1411
        %v1413 = vsel %vm1200, %v898, %v1140
        %v1414 = vsel %vm1202, %v1142, %v1141
        %v1415 = vsel %vm1204, %v1413, %v1414
        %v1416 = vrot.slane %v1415, 2
        %v1417 = vsel %vm1196, %v898, %v1140
        %v1418 = vsel %vm1194, %v1141, %v1142
        %v1419 = vsel %vm1198, %v1418, %v1417
        %v1420 = vrot.slane %v1419, 4
        %v1421 = vsel %vm1202, %v1140, %v898
        %v1422 = vsel %vm1200, %v1141, %v1142
        %v1423 = vsel %vm1204, %v1422, %v1421
        %v1424 = vrot.slane %v1423, 6
        %v1425 = vsel %vm1194, %v902, %v1143
        %v1426 = vsel %vm1196, %v1144, %v1145
        %v1427 = vsel %vm1198, %v1425, %v1426
        %v1428 = vsel %vm1200, %v902, %v1143
        %v1429 = vsel %vm1202, %v1145, %v1144
        %v1430 = vsel %vm1204, %v1428, %v1429
        %v1431 = vrot.slane %v1430, 2
        %v1432 = vsel %vm1196, %v902, %v1143
        %v1433 = vsel %vm1194, %v1144, %v1145
        %v1434 = vsel %vm1198, %v1433, %v1432
        %v1435 = vrot.slane %v1434, 4
        %v1436 = vsel %vm1202, %v1143, %v902
        %v1437 = vsel %vm1200, %v1144, %v1145
        %v1438 = vsel %vm1204, %v1437, %v1436
        %v1439 = vrot.slane %v1438, 6
        %v1440 = vsel %vm1194, %v906, %v1146
        %v1441 = vsel %vm1196, %v1147, %v1148
        %v1442 = vsel %vm1198, %v1440, %v1441
        %v1443 = vsel %vm1200, %v906, %v1146
        %v1444 = vsel %vm1202, %v1148, %v1147
        %v1445 = vsel %vm1204, %v1443, %v1444
        %v1446 = vrot.slane %v1445, 2
        %v1447 = vsel %vm1196, %v906, %v1146
        %v1448 = vsel %vm1194, %v1147, %v1148
        %v1449 = vsel %vm1198, %v1448, %v1447
        %v1450 = vrot.slane %v1449, 4
        %v1451 = vsel %vm1202, %v1146, %v906
        %v1452 = vsel %vm1200, %v1147, %v1148
        %v1453 = vsel %vm1204, %v1452, %v1451
        %v1454 = vrot.slane %v1453, 6
        %v1455 = vsel %vm1194, %v910, %v1149
        %v1456 = vsel %vm1196, %v1150, %v1151
        %v1457 = vsel %vm1198, %v1455, %v1456
        %v1458 = vsel %vm1200, %v910, %v1149
        %v1459 = vsel %vm1202, %v1151, %v1150
        %v1460 = vsel %vm1204, %v1458, %v1459
        %v1461 = vrot.slane %v1460, 2
        %v1462 = vsel %vm1196, %v910, %v1149
        %v1463 = vsel %vm1194, %v1150, %v1151
        %v1464 = vsel %vm1198, %v1463, %v1462
        %v1465 = vrot.slane %v1464, 4
        %v1466 = vsel %vm1202, %v1149, %v910
        %v1467 = vsel %vm1200, %v1150, %v1151
        %v1468 = vsel %vm1204, %v1467, %v1466
        %v1469 = vrot.slane %v1468, 6
        %v1470 = vsel %vm1194, %v914, %v1152
        %v1471 = vsel %vm1196, %v1153, %v1154
        %v1472 = vsel %vm1198, %v1470, %v1471
        %v1473 = vsel %vm1200, %v914, %v1152
        %v1474 = vsel %vm1202, %v1154, %v1153
        %v1475 = vsel %vm1204, %v1473, %v1474
        %v1476 = vrot.slane %v1475, 2
        %v1477 = vsel %vm1196, %v914, %v1152
        %v1478 = vsel %vm1194, %v1153, %v1154
        %v1479 = vsel %vm1198, %v1478, %v1477
        %v1480 = vrot.slane %v1479, 4
        %v1481 = vsel %vm1202, %v1152, %v914
        %v1482 = vsel %vm1200, %v1153, %v1154
        %v1483 = vsel %vm1204, %v1482, %v1481
        %v1484 = vrot.slane %v1483, 6
        %v1485 = vsel %vm1194, %v918, %v1155
        %v1486 = vsel %vm1196, %v1156, %v1157
        %v1487 = vsel %vm1198, %v1485, %v1486
        %v1488 = vsel %vm1200, %v918, %v1155
        %v1489 = vsel %vm1202, %v1157, %v1156
        %v1490 = vsel %vm1204, %v1488, %v1489
        %v1491 = vrot.slane %v1490, 2
        %v1492 = vsel %vm1196, %v918, %v1155
        %v1493 = vsel %vm1194, %v1156, %v1157
        %v1494 = vsel %vm1198, %v1493, %v1492
        %v1495 = vrot.slane %v1494, 4
        %v1496 = vsel %vm1202, %v1155, %v918
        %v1497 = vsel %vm1200, %v1156, %v1157
        %v1498 = vsel %vm1204, %v1497, %v1496
        %v1499 = vrot.slane %v1498, 6
        %v1500 = vsel %vm1194, %v922, %v1158
        %v1501 = vsel %vm1196, %v1159, %v1160
        %v1502 = vsel %vm1198, %v1500, %v1501
        %v1503 = vsel %vm1200, %v922, %v1158
        %v1504 = vsel %vm1202, %v1160, %v1159
        %v1505 = vsel %vm1204, %v1503, %v1504
        %v1506 = vrot.slane %v1505, 2
        %v1507 = vsel %vm1196, %v922, %v1158
        %v1508 = vsel %vm1194, %v1159, %v1160
        %v1509 = vsel %vm1198, %v1508, %v1507
        %v1510 = vrot.slane %v1509, 4
        %v1511 = vsel %vm1202, %v1158, %v922
        %v1512 = vsel %vm1200, %v1159, %v1160
        %v1513 = vsel %vm1204, %v1512, %v1511
        %v1514 = vrot.slane %v1513, 6
        %v1515 = vsel %vm1194, %v926, %v1161
        %v1516 = vsel %vm1196, %v1162, %v1163
        %v1517 = vsel %vm1198, %v1515, %v1516
        %v1518 = vsel %vm1200, %v926, %v1161
        %v1519 = vsel %vm1202, %v1163, %v1162
        %v1520 = vsel %vm1204, %v1518, %v1519
        %v1521 = vrot.slane %v1520, 2
        %v1522 = vsel %vm1196, %v926, %v1161
        %v1523 = vsel %vm1194, %v1162, %v1163
        %v1524 = vsel %vm1198, %v1523, %v1522
        %v1525 = vrot.slane %v1524, 4
        %v1526 = vsel %vm1202, %v1161, %v926
        %v1527 = vsel %vm1200, %v1162, %v1163
        %v1528 = vsel %vm1204, %v1527, %v1526
        %v1529 = vrot.slane %v1528, 6
        %v1530 = vsel %vm1194, %v930, %v1164
        %v1531 = vsel %vm1196, %v1165, %v1166
        %v1532 = vsel %vm1198, %v1530, %v1531
        %v1533 = vsel %vm1200, %v930, %v1164
        %v1534 = vsel %vm1202, %v1166, %v1165
        %v1535 = vsel %vm1204, %v1533, %v1534
        %v1536 = vrot.slane %v1535, 2
        %v1537 = vsel %vm1196, %v930, %v1164
        %v1538 = vsel %vm1194, %v1165, %v1166
        %v1539 = vsel %vm1198, %v1538, %v1537
        %v1540 = vrot.slane %v1539, 4
        %v1541 = vsel %vm1202, %v1164, %v930
        %v1542 = vsel %vm1200, %v1165, %v1166
        %v1543 = vsel %vm1204, %v1542, %v1541
        %v1544 = vrot.slane %v1543, 6
        %v1545 = vsel %vm1194, %v934, %v1167
        %v1546 = vsel %vm1196, %v1168, %v1169
        %v1547 = vsel %vm1198, %v1545, %v1546
        %v1548 = vsel %vm1200, %v934, %v1167
        %v1549 = vsel %vm1202, %v1169, %v1168
        %v1550 = vsel %vm1204, %v1548, %v1549
        %v1551 = vrot.slane %v1550, 2
        %v1552 = vsel %vm1196, %v934, %v1167
        %v1553 = vsel %vm1194, %v1168, %v1169
        %v1554 = vsel %vm1198, %v1553, %v1552
        %v1555 = vrot.slane %v1554, 4
        %v1556 = vsel %vm1202, %v1167, %v934
        %v1557 = vsel %vm1200, %v1168, %v1169
        %v1558 = vsel %vm1204, %v1557, %v1556
        %v1559 = vrot.slane %v1558, 6
        %v1560 = vsel %vm1194, %v938, %v1170
        %v1561 = vsel %vm1196, %v1171, %v1172
        %v1562 = vsel %vm1198, %v1560, %v1561
        %v1563 = vsel %vm1200, %v938, %v1170
        %v1564 = vsel %vm1202, %v1172, %v1171
        %v1565 = vsel %vm1204, %v1563, %v1564
        %v1566 = vrot.slane %v1565, 2
        %v1567 = vsel %vm1196, %v938, %v1170
        %v1568 = vsel %vm1194, %v1171, %v1172
        %v1569 = vsel %vm1198, %v1568, %v1567
        %v1570 = vrot.slane %v1569, 4
        %v1571 = vsel %vm1202, %v1170, %v938
        %v1572 = vsel %vm1200, %v1171, %v1172
        %v1573 = vsel %vm1204, %v1572, %v1571
        %v1574 = vrot.slane %v1573, 6
        %v1575 = vsel %vm1194, %v942, %v1173
        %v1576 = vsel %vm1196, %v1174, %v1175
        %v1577 = vsel %vm1198, %v1575, %v1576
        %v1578 = vsel %vm1200, %v942, %v1173
        %v1579 = vsel %vm1202, %v1175, %v1174
        %v1580 = vsel %vm1204, %v1578, %v1579
        %v1581 = vrot.slane %v1580, 2
        %v1582 = vsel %vm1196, %v942, %v1173
        %v1583 = vsel %vm1194, %v1174, %v1175
        %v1584 = vsel %vm1198, %v1583, %v1582
        %v1585 = vrot.slane %v1584, 4
        %v1586 = vsel %vm1202, %v1173, %v942
        %v1587 = vsel %vm1200, %v1174, %v1175
        %v1588 = vsel %vm1204, %v1587, %v1586
        %v1589 = vrot.slane %v1588, 6
        %v1590 = vsel %vm1194, %v946, %v1176
        %v1591 = vsel %vm1196, %v1177, %v1178
        %v1592 = vsel %vm1198, %v1590, %v1591
        %v1593 = vsel %vm1200, %v946, %v1176
        %v1594 = vsel %vm1202, %v1178, %v1177
        %v1595 = vsel %vm1204, %v1593, %v1594
        %v1596 = vrot.slane %v1595, 2
        %v1597 = vsel %vm1196, %v946, %v1176
        %v1598 = vsel %vm1194, %v1177, %v1178
        %v1599 = vsel %vm1198, %v1598, %v1597
        %v1600 = vrot.slane %v1599, 4
        %v1601 = vsel %vm1202, %v1176, %v946
        %v1602 = vsel %vm1200, %v1177, %v1178
        %v1603 = vsel %vm1204, %v1602, %v1601
        %v1604 = vrot.slane %v1603, 6
        %v1605 = vsel %vm1194, %v950, %v1179
        %v1606 = vsel %vm1196, %v1180, %v1181
        %v1607 = vsel %vm1198, %v1605, %v1606
        %v1608 = vsel %vm1200, %v950, %v1179
        %v1609 = vsel %vm1202, %v1181, %v1180
        %v1610 = vsel %vm1204, %v1608, %v1609
        %v1611 = vrot.slane %v1610, 2
        %v1612 = vsel %vm1196, %v950, %v1179
        %v1613 = vsel %vm1194, %v1180, %v1181
        %v1614 = vsel %vm1198, %v1613, %v1612
        %v1615 = vrot.slane %v1614, 4
        %v1616 = vsel %vm1202, %v1179, %v950
        %v1617 = vsel %vm1200, %v1180, %v1181
        %v1618 = vsel %vm1204, %v1617, %v1616
        %v1619 = vrot.slane %v1618, 6
        %v1620 = vsel %vm1194, %v954, %v1182
        %v1621 = vsel %vm1196, %v1183, %v1184
        %v1622 = vsel %vm1198, %v1620, %v1621
        %v1623 = vsel %vm1200, %v954, %v1182
        %v1624 = vsel %vm1202, %v1184, %v1183
        %v1625 = vsel %vm1204, %v1623, %v1624
        %v1626 = vrot.slane %v1625, 2
        %v1627 = vsel %vm1196, %v954, %v1182
        %v1628 = vsel %vm1194, %v1183, %v1184
        %v1629 = vsel %vm1198, %v1628, %v1627
        %v1630 = vrot.slane %v1629, 4
        %v1631 = vsel %vm1202, %v1182, %v954
        %v1632 = vsel %vm1200, %v1183, %v1184
        %v1633 = vsel %vm1204, %v1632, %v1631
        %v1634 = vrot.slane %v1633, 6
        %v1635 = vsel %vm1194, %v958, %v1185
        %v1636 = vsel %vm1196, %v1186, %v1187
        %v1637 = vsel %vm1198, %v1635, %v1636
        %v1638 = vsel %vm1200, %v958, %v1185
        %v1639 = vsel %vm1202, %v1187, %v1186
        %v1640 = vsel %vm1204, %v1638, %v1639
        %v1641 = vrot.slane %v1640, 2
        %v1642 = vsel %vm1196, %v958, %v1185
        %v1643 = vsel %vm1194, %v1186, %v1187
        %v1644 = vsel %vm1198, %v1643, %v1642
        %v1645 = vrot.slane %v1644, 4
        %v1646 = vsel %vm1202, %v1185, %v958
        %v1647 = vsel %vm1200, %v1186, %v1187
        %v1648 = vsel %vm1204, %v1647, %v1646
        %v1649 = vrot.slane %v1648, 6
        %v1650 = vsel %vm1194, %v962, %v1188
        %v1651 = vsel %vm1196, %v1189, %v1190
        %v1652 = vsel %vm1198, %v1650, %v1651
        %v1653 = vsel %vm1200, %v962, %v1188
        %v1654 = vsel %vm1202, %v1190, %v1189
        %v1655 = vsel %vm1204, %v1653, %v1654
        %v1656 = vrot.slane %v1655, 2
        %v1657 = vsel %vm1196, %v962, %v1188
        %v1658 = vsel %vm1194, %v1189, %v1190
        %v1659 = vsel %vm1198, %v1658, %v1657
        %v1660 = vrot.slane %v1659, 4
        %v1661 = vsel %vm1202, %v1188, %v962
        %v1662 = vsel %vm1200, %v1189, %v1190
        %v1663 = vsel %vm1204, %v1662, %v1661
        %v1664 = vrot.slane %v1663, 6
        %v1665 = vsel %vm1194, %v966, %v1191
        %v1666 = vsel %vm1196, %v1192, %v1193
        %v1667 = vsel %vm1198, %v1665, %v1666
        %v1668 = vsel %vm1200, %v966, %v1191
        %v1669 = vsel %vm1202, %v1193, %v1192
        %v1670 = vsel %vm1204, %v1668, %v1669
        %v1671 = vrot.slane %v1670, 2
        %v1672 = vsel %vm1196, %v966, %v1191
        %v1673 = vsel %vm1194, %v1192, %v1193
        %v1674 = vsel %vm1198, %v1673, %v1672
        %v1675 = vrot.slane %v1674, 4
        %v1676 = vsel %vm1202, %v1191, %v966
        %v1677 = vsel %vm1200, %v1192, %v1193
        %v1678 = vsel %vm1204, %v1677, %v1676
        %v1679 = vrot.slane %v1678, 6
        %v1808 = vrot.slane %v1199, 7
        %v1809 = vrot.slane %v1808, 2
        %v1810 = vrot.slane %v1206, 7
        %v1811 = vrot.slane %v1810, 2
        %v1812 = vrot.slane %v1210, 7
        %v1813 = vrot.slane %v1812, 2
        %v1814 = vrot.slane %v1214, 7
        %v1815 = vrot.slane %v1814, 2
        %v1816 = vrot.slane %v1217, 7
        %v1817 = vrot.slane %v1816, 2
        %v1818 = vrot.slane %v1221, 7
        %v1819 = vrot.slane %v1818, 2
        %v1820 = vrot.slane %v1225, 7
        %v1821 = vrot.slane %v1820, 2
        %v1822 = vrot.slane %v1229, 7
        %v1823 = vrot.slane %v1822, 2
        %v1824 = vrot.slane %v1262, 7
        %v1825 = vrot.slane %v1824, 2
        %v1826 = vrot.slane %v1266, 7
        %v1827 = vrot.slane %v1826, 2
        %v1828 = vrot.slane %v1270, 7
        %v1829 = vrot.slane %v1828, 2
        %v1830 = vrot.slane %v1274, 7
        %v1831 = vrot.slane %v1830, 2
        %v1832 = vrot.slane %v1277, 7
        %v1833 = vrot.slane %v1832, 2
        %v1834 = vrot.slane %v1281, 7
        %v1835 = vrot.slane %v1834, 2
        %v1836 = vrot.slane %v1285, 7
        %v1837 = vrot.slane %v1836, 2
        %v1838 = vrot.slane %v1289, 7
        %v1839 = vrot.slane %v1838, 2
        %v1840 = vrot.slane %v1322, 7
        %v1841 = vrot.slane %v1840, 2
        %v1842 = vrot.slane %v1326, 7
        %v1843 = vrot.slane %v1842, 2
        %v1844 = vrot.slane %v1330, 7
        %v1845 = vrot.slane %v1844, 2
        %v1846 = vrot.slane %v1334, 7
        %v1847 = vrot.slane %v1846, 2
        %v1848 = vrot.slane %v1337, 7
        %v1849 = vrot.slane %v1848, 2
        %v1850 = vrot.slane %v1341, 7
        %v1851 = vrot.slane %v1850, 2
        %v1852 = vrot.slane %v1345, 7
        %v1853 = vrot.slane %v1852, 2
        %v1854 = vrot.slane %v1349, 7
        %v1855 = vrot.slane %v1854, 2
        %v1856 = vrot.slane %v1382, 7
        %v1857 = vrot.slane %v1856, 2
        %v1858 = vrot.slane %v1386, 7
        %v1859 = vrot.slane %v1858, 2
        %v1860 = vrot.slane %v1390, 7
        %v1861 = vrot.slane %v1860, 2
        %v1862 = vrot.slane %v1394, 7
        %v1863 = vrot.slane %v1862, 2
        %v1864 = vrot.slane %v1397, 7
        %v1865 = vrot.slane %v1864, 2
        %v1866 = vrot.slane %v1401, 7
        %v1867 = vrot.slane %v1866, 2
        %v1868 = vrot.slane %v1405, 7
        %v1869 = vrot.slane %v1868, 2
        %v1870 = vrot.slane %v1409, 7
        %v1871 = vrot.slane %v1870, 2
        %v1872 = vrot.slane %v1442, 7
        %v1873 = vrot.slane %v1872, 2
        %v1874 = vrot.slane %v1446, 7
        %v1875 = vrot.slane %v1874, 2
        %v1876 = vrot.slane %v1450, 7
        %v1877 = vrot.slane %v1876, 2
        %v1878 = vrot.slane %v1454, 7
        %v1879 = vrot.slane %v1878, 2
        %v1880 = vrot.slane %v1457, 7
        %v1881 = vrot.slane %v1880, 2
        %v1882 = vrot.slane %v1461, 7
        %v1883 = vrot.slane %v1882, 2
        %v1884 = vrot.slane %v1465, 7
        %v1885 = vrot.slane %v1884, 2
        %v1886 = vrot.slane %v1469, 7
        %v1887 = vrot.slane %v1886, 2
        %v1888 = vrot.slane %v1502, 7
        %v1889 = vrot.slane %v1888, 2
        %v1890 = vrot.slane %v1506, 7
        %v1891 = vrot.slane %v1890, 2
        %v1892 = vrot.slane %v1510, 7
        %v1893 = vrot.slane %v1892, 2
        %v1894 = vrot.slane %v1514, 7
        %v1895 = vrot.slane %v1894, 2
        %v1896 = vrot.slane %v1517, 7
        %v1897 = vrot.slane %v1896, 2
        %v1898 = vrot.slane %v1521, 7
        %v1899 = vrot.slane %v1898, 2
        %v1900 = vrot.slane %v1525, 7
        %v1901 = vrot.slane %v1900, 2
        %v1902 = vrot.slane %v1529, 7
        %v1903 = vrot.slane %v1902, 2
        %v1904 = vrot.slane %v1562, 7
        %v1905 = vrot.slane %v1904, 2
        %v1906 = vrot.slane %v1566, 7
        %v1907 = vrot.slane %v1906, 2
        %v1908 = vrot.slane %v1570, 7
        %v1909 = vrot.slane %v1908, 2
        %v1910 = vrot.slane %v1574, 7
        %v1911 = vrot.slane %v1910, 2
        %v1912 = vrot.slane %v1577, 7
        %v1913 = vrot.slane %v1912, 2
        %v1914 = vrot.slane %v1581, 7
        %v1915 = vrot.slane %v1914, 2
        %v1916 = vrot.slane %v1585, 7
        %v1917 = vrot.slane %v1916, 2
        %v1918 = vrot.slane %v1589, 7
        %v1919 = vrot.slane %v1918, 2
        %v1920 = vrot.slane %v1622, 7
        %v1921 = vrot.slane %v1920, 2
        %v1922 = vrot.slane %v1626, 7
        %v1923 = vrot.slane %v1922, 2
        %v1924 = vrot.slane %v1630, 7
        %v1925 = vrot.slane %v1924, 2
        %v1926 = vrot.slane %v1634, 7
        %v1927 = vrot.slane %v1926, 2
        %v1928 = vrot.slane %v1637, 7
        %v1929 = vrot.slane %v1928, 2
        %v1930 = vrot.slane %v1641, 7
        %v1931 = vrot.slane %v1930, 2
        %v1932 = vrot.slane %v1645, 7
        %v1933 = vrot.slane %v1932, 2
        %v1934 = vrot.slane %v1649, 7
        %v1935 = vrot.slane %v1934, 2
        %v2000 = vmax.f32 %v1199, %v1809
        %v2001 = vmax.f32 %v1206, %v1811
        %v2002 = vmax.f32 %v1210, %v1813
        %v2003 = vmax.f32 %v1214, %v1815
        %v2004 = vmax.f32 %v1217, %v1817
        %v2005 = vmax.f32 %v1221, %v1819
        %v2006 = vmax.f32 %v1225, %v1821
        %v2007 = vmax.f32 %v1229, %v1823
        %v2008 = vmax.f32 %v1262, %v1825
        %v2009 = vmax.f32 %v1266, %v1827
        %v2010 = vmax.f32 %v1270, %v1829
        %v2011 = vmax.f32 %v1274, %v1831
        %v2012 = vmax.f32 %v1277, %v1833
        %v2013 = vmax.f32 %v1281, %v1835
        %v2014 = vmax.f32 %v1285, %v1837
        %v2015 = vmax.f32 %v1289, %v1839
        %v2016 = vmax.f32 %v1322, %v1841
        %v2017 = vmax.f32 %v1326, %v1843
        %v2018 = vmax.f32 %v1330, %v1845
        %v2019 = vmax.f32 %v1334, %v1847
        %v2020 = vmax.f32 %v1337, %v1849
        %v2021 = vmax.f32 %v1341, %v1851
        %v2022 = vmax.f32 %v1345, %v1853
        %v2023 = vmax.f32 %v1349, %v1855
        %v2024 = vmax.f32 %v1382, %v1857
        %v2025 = vmax.f32 %v1386, %v1859
        %v2026 = vmax.f32 %v1390, %v1861
        %v2027 = vmax.f32 %v1394, %v1863
        %v2028 = vmax.f32 %v1397, %v1865
        %v2029 = vmax.f32 %v1401, %v1867
        %v2030 = vmax.f32 %v1405, %v1869
        %v2031 = vmax.f32 %v1409, %v1871
        %v2032 = vmax.f32 %v1442, %v1873
        %v2033 = vmax.f32 %v1446, %v1875
        %v2034 = vmax.f32 %v1450, %v1877
        %v2035 = vmax.f32 %v1454, %v1879
        %v2036 = vmax.f32 %v1457, %v1881
        %v2037 = vmax.f32 %v1461, %v1883
        %v2038 = vmax.f32 %v1465, %v1885
        %v2039 = vmax.f32 %v1469, %v1887
        %v2040 = vmax.f32 %v1502, %v1889
        %v2041 = vmax.f32 %v1506, %v1891
        %v2042 = vmax.f32 %v1510, %v1893
        %v2043 = vmax.f32 %v1514, %v1895
        %v2044 = vmax.f32 %v1517, %v1897
        %v2045 = vmax.f32 %v1521, %v1899
        %v2046 = vmax.f32 %v1525, %v1901
        %v2047 = vmax.f32 %v1529, %v1903
        %v2048 = vmax.f32 %v1562, %v1905
        %v2049 = vmax.f32 %v1566, %v1907
        %v2050 = vmax.f32 %v1570, %v1909
        %v2051 = vmax.f32 %v1574, %v1911
        %v2052 = vmax.f32 %v1577, %v1913
        %v2053 = vmax.f32 %v1581, %v1915
        %v2054 = vmax.f32 %v1585, %v1917
        %v2055 = vmax.f32 %v1589, %v1919
        %v2056 = vmax.f32 %v1622, %v1921
        %v2057 = vmax.f32 %v1626, %v1923
        %v2058 = vmax.f32 %v1630, %v1925
        %v2059 = vmax.f32 %v1634, %v1927
        %v2060 = vmax.f32 %v1637, %v1929
        %v2061 = vmax.f32 %v1641, %v1931
        %v2062 = vmax.f32 %v1645, %v1933
        %v2063 = vmax.f32 %v1649, %v1935
        %v2064 = vrot.slane %v1232, 7
        %v2065 = vrot.slane %v2064, 2
        %v2066 = vrot.slane %v1236, 7
        %v2067 = vrot.slane %v2066, 2
        %v2068 = vrot.slane %v1240, 7
        %v2069 = vrot.slane %v2068, 2
        %v2070 = vrot.slane %v1244, 7
        %v2071 = vrot.slane %v2070, 2
        %v2072 = vrot.slane %v1247, 7
        %v2073 = vrot.slane %v2072, 2
        %v2074 = vrot.slane %v1251, 7
        %v2075 = vrot.slane %v2074, 2
        %v2076 = vrot.slane %v1255, 7
        %v2077 = vrot.slane %v2076, 2
        %v2078 = vrot.slane %v1259, 7
        %v2079 = vrot.slane %v2078, 2
        %v2080 = vrot.slane %v1292, 7
        %v2081 = vrot.slane %v2080, 2
        %v2082 = vrot.slane %v1296, 7
        %v2083 = vrot.slane %v2082, 2
        %v2084 = vrot.slane %v1300, 7
        %v2085 = vrot.slane %v2084, 2
        %v2086 = vrot.slane %v1304, 7
        %v2087 = vrot.slane %v2086, 2
        %v2088 = vrot.slane %v1307, 7
        %v2089 = vrot.slane %v2088, 2
        %v2090 = vrot.slane %v1311, 7
        %v2091 = vrot.slane %v2090, 2
        %v2092 = vrot.slane %v1315, 7
        %v2093 = vrot.slane %v2092, 2
        %v2094 = vrot.slane %v1319, 7
        %v2095 = vrot.slane %v2094, 2
        %v2096 = vrot.slane %v1352, 7
        %v2097 = vrot.slane %v2096, 2
        %v2098 = vrot.slane %v1356, 7
        %v2099 = vrot.slane %v2098, 2
        %v2100 = vrot.slane %v1360, 7
        %v2101 = vrot.slane %v2100, 2
        %v2102 = vrot.slane %v1364, 7
        %v2103 = vrot.slane %v2102, 2
        %v2104 = vrot.slane %v1367, 7
        %v2105 = vrot.slane %v2104, 2
        %v2106 = vrot.slane %v1371, 7
        %v2107 = vrot.slane %v2106, 2
        %v2108 = vrot.slane %v1375, 7
        %v2109 = vrot.slane %v2108, 2
        %v2110 = vrot.slane %v1379, 7
        %v2111 = vrot.slane %v2110, 2
        %v2112 = vrot.slane %v1412, 7
        %v2113 = vrot.slane %v2112, 2
        %v2114 = vrot.slane %v1416, 7
        %v2115 = vrot.slane %v2114, 2
        %v2116 = vrot.slane %v1420, 7
        %v2117 = vrot.slane %v2116, 2
        %v2118 = vrot.slane %v1424, 7
        %v2119 = vrot.slane %v2118, 2
        %v2120 = vrot.slane %v1427, 7
        %v2121 = vrot.slane %v2120, 2
        %v2122 = vrot.slane %v1431, 7
        %v2123 = vrot.slane %v2122, 2
        %v2124 = vrot.slane %v1435, 7
        %v2125 = vrot.slane %v2124, 2
        %v2126 = vrot.slane %v1439, 7
        %v2127 = vrot.slane %v2126, 2
        %v2128 = vrot.slane %v1472, 7
        %v2129 = vrot.slane %v2128, 2
        %v2130 = vrot.slane %v1476, 7
        %v2131 = vrot.slane %v2130, 2
        %v2132 = vrot.slane %v1480, 7
        %v2133 = vrot.slane %v2132, 2
        %v2134 = vrot.slane %v1484, 7
        %v2135 = vrot.slane %v2134, 2
        %v2136 = vrot.slane %v1487, 7
        %v2137 = vrot.slane %v2136, 2
        %v2138 = vrot.slane %v1491, 7
        %v2139 = vrot.slane %v2138, 2
        %v2140 = vrot.slane %v1495, 7
        %v2141 = vrot.slane %v2140, 2
        %v2142 = vrot.slane %v1499, 7
        %v2143 = vrot.slane %v2142, 2
        %v2144 = vrot.slane %v1532, 7
        %v2145 = vrot.slane %v2144, 2
        %v2146 = vrot.slane %v1536, 7
        %v2147 = vrot.slane %v2146, 2
        %v2148 = vrot.slane %v1540, 7
        %v2149 = vrot.slane %v2148, 2
        %v2150 = vrot.slane %v1544, 7
        %v2151 = vrot.slane %v2150, 2
        %v2152 = vrot.slane %v1547, 7
        %v2153 = vrot.slane %v2152, 2
        %v2154 = vrot.slane %v1551, 7
        %v2155 = vrot.slane %v2154, 2
        %v2156 = vrot.slane %v1555, 7
        %v2157 = vrot.slane %v2156, 2
        %v2158 = vrot.slane %v1559, 7
        %v2159 = vrot.slane %v2158, 2
        %v2160 = vrot.slane %v1592, 7
        %v2161 = vrot.slane %v2160, 2
        %v2162 = vrot.slane %v1596, 7
        %v2163 = vrot.slane %v2162, 2
        %v2164 = vrot.slane %v1600, 7
        %v2165 = vrot.slane %v2164, 2
        %v2166 = vrot.slane %v1604, 7
        %v2167 = vrot.slane %v2166, 2
        %v2168 = vrot.slane %v1607, 7
        %v2169 = vrot.slane %v2168, 2
        %v2170 = vrot.slane %v1611, 7
        %v2171 = vrot.slane %v2170, 2
        %v2172 = vrot.slane %v1615, 7
        %v2173 = vrot.slane %v2172, 2
        %v2174 = vrot.slane %v1619, 7
        %v2175 = vrot.slane %v2174, 2
        %v2176 = vrot.slane %v1652, 7
        %v2177 = vrot.slane %v2176, 2
        %v2178 = vrot.slane %v1656, 7
        %v2179 = vrot.slane %v2178, 2
        %v2180 = vrot.slane %v1660, 7
        %v2181 = vrot.slane %v2180, 2
        %v2182 = vrot.slane %v1664, 7
        %v2183 = vrot.slane %v2182, 2
        %v2184 = vrot.slane %v1667, 7
        %v2185 = vrot.slane %v2184, 2
        %v2186 = vrot.slane %v1671, 7
        %v2187 = vrot.slane %v2186, 2
        %v2188 = vrot.slane %v1675, 7
        %v2189 = vrot.slane %v2188, 2
        %v2190 = vrot.slane %v1679, 7
        %v2191 = vrot.slane %v2190, 2
        %v2256 = vmax.f32 %v1232, %v2065
        %v2257 = vmax.f32 %v1236, %v2067
        %v2258 = vmax.f32 %v1240, %v2069
        %v2259 = vmax.f32 %v1244, %v2071
        %v2260 = vmax.f32 %v1247, %v2073
        %v2261 = vmax.f32 %v1251, %v2075
        %v2262 = vmax.f32 %v1255, %v2077
        %v2263 = vmax.f32 %v1259, %v2079
        %v2264 = vmax.f32 %v1292, %v2081
        %v2265 = vmax.f32 %v1296, %v2083
        %v2266 = vmax.f32 %v1300, %v2085
        %v2267 = vmax.f32 %v1304, %v2087
        %v2268 = vmax.f32 %v1307, %v2089
        %v2269 = vmax.f32 %v1311, %v2091
        %v2270 = vmax.f32 %v1315, %v2093
        %v2271 = vmax.f32 %v1319, %v2095
        %v2272 = vmax.f32 %v1352, %v2097
        %v2273 = vmax.f32 %v1356, %v2099
        %v2274 = vmax.f32 %v1360, %v2101
        %v2275 = vmax.f32 %v1364, %v2103
        %v2276 = vmax.f32 %v1367, %v2105
        %v2277 = vmax.f32 %v1371, %v2107
        %v2278 = vmax.f32 %v1375, %v2109
        %v2279 = vmax.f32 %v1379, %v2111
        %v2280 = vmax.f32 %v1412, %v2113
        %v2281 = vmax.f32 %v1416, %v2115
        %v2282 = vmax.f32 %v1420, %v2117
        %v2283 = vmax.f32 %v1424, %v2119
        %v2284 = vmax.f32 %v1427, %v2121
        %v2285 = vmax.f32 %v1431, %v2123
        %v2286 = vmax.f32 %v1435, %v2125
        %v2287 = vmax.f32 %v1439, %v2127
        %v2288 = vmax.f32 %v1472, %v2129
        %v2289 = vmax.f32 %v1476, %v2131
        %v2290 = vmax.f32 %v1480, %v2133
        %v2291 = vmax.f32 %v1484, %v2135
        %v2292 = vmax.f32 %v1487, %v2137
        %v2293 = vmax.f32 %v1491, %v2139
        %v2294 = vmax.f32 %v1495, %v2141
        %v2295 = vmax.f32 %v1499, %v2143
        %v2296 = vmax.f32 %v1532, %v2145
        %v2297 = vmax.f32 %v1536, %v2147
        %v2298 = vmax.f32 %v1540, %v2149
        %v2299 = vmax.f32 %v1544, %v2151
        %v2300 = vmax.f32 %v1547, %v2153
        %v2301 = vmax.f32 %v1551, %v2155
        %v2302 = vmax.f32 %v1555, %v2157
        %v2303 = vmax.f32 %v1559, %v2159
        %v2304 = vmax.f32 %v1592, %v2161
        %v2305 = vmax.f32 %v1596, %v2163
        %v2306 = vmax.f32 %v1600, %v2165
        %v2307 = vmax.f32 %v1604, %v2167
        %v2308 = vmax.f32 %v1607, %v2169
        %v2309 = vmax.f32 %v1611, %v2171
        %v2310 = vmax.f32 %v1615, %v2173
        %v2311 = vmax.f32 %v1619, %v2175
        %v2312 = vmax.f32 %v1652, %v2177
        %v2313 = vmax.f32 %v1656, %v2179
        %v2314 = vmax.f32 %v1660, %v2181
        %v2315 = vmax.f32 %v1664, %v2183
        %v2316 = vmax.f32 %v1667, %v2185
        %v2317 = vmax.f32 %v1671, %v2187
        %v2318 = vmax.f32 %v1675, %v2189
        %v2319 = vmax.f32 %v1679, %v2191
        %v2320 = vmax.f32 %v2000, %v2256
        %v2321 = vmax.f32 %v2001, %v2257
        %v2322 = vmax.f32 %v2002, %v2258
        %v2323 = vmax.f32 %v2003, %v2259
        %v2324 = vmax.f32 %v2004, %v2260
        %v2325 = vmax.f32 %v2005, %v2261
        %v2326 = vmax.f32 %v2006, %v2262
        %v2327 = vmax.f32 %v2007, %v2263
        %v2328 = vmax.f32 %v2008, %v2264
        %v2329 = vmax.f32 %v2009, %v2265
        %v2330 = vmax.f32 %v2010, %v2266
        %v2331 = vmax.f32 %v2011, %v2267
        %v2332 = vmax.f32 %v2012, %v2268
        %v2333 = vmax.f32 %v2013, %v2269
        %v2334 = vmax.f32 %v2014, %v2270
        %v2335 = vmax.f32 %v2015, %v2271
        %v2336 = vmax.f32 %v2016, %v2272
        %v2337 = vmax.f32 %v2017, %v2273
        %v2338 = vmax.f32 %v2018, %v2274
        %v2339 = vmax.f32 %v2019, %v2275
        %v2340 = vmax.f32 %v2020, %v2276
        %v2341 = vmax.f32 %v2021, %v2277
        %v2342 = vmax.f32 %v2022, %v2278
        %v2343 = vmax.f32 %v2023, %v2279
        %v2344 = vmax.f32 %v2024, %v2280
        %v2345 = vmax.f32 %v2025, %v2281
        %v2346 = vmax.f32 %v2026, %v2282
        %v2347 = vmax.f32 %v2027, %v2283
        %v2348 = vmax.f32 %v2028, %v2284
        %v2349 = vmax.f32 %v2029, %v2285
        %v2350 = vmax.f32 %v2030, %v2286
        %v2351 = vmax.f32 %v2031, %v2287
        %v2352 = vmax.f32 %v2032, %v2288
        %v2353 = vmax.f32 %v2033, %v2289
        %v2354 = vmax.f32 %v2034, %v2290
        %v2355 = vmax.f32 %v2035, %v2291
        %v2356 = vmax.f32 %v2036, %v2292
        %v2357 = vmax.f32 %v2037, %v2293
        %v2358 = vmax.f32 %v2038, %v2294
        %v2359 = vmax.f32 %v2039, %v2295
        %v2360 = vmax.f32 %v2040, %v2296
        %v2361 = vmax.f32 %v2041, %v2297
        %v2362 = vmax.f32 %v2042, %v2298
        %v2363 = vmax.f32 %v2043, %v2299
        %v2364 = vmax.f32 %v2044, %v2300
        %v2365 = vmax.f32 %v2045, %v2301
        %v2366 = vmax.f32 %v2046, %v2302
        %v2367 = vmax.f32 %v2047, %v2303
        %v2368 = vmax.f32 %v2048, %v2304
        %v2369 = vmax.f32 %v2049, %v2305
        %v2370 = vmax.f32 %v2050, %v2306
        %v2371 = vmax.f32 %v2051, %v2307
        %v2372 = vmax.f32 %v2052, %v2308
        %v2373 = vmax.f32 %v2053, %v2309
        %v2374 = vmax.f32 %v2054, %v2310
        %v2375 = vmax.f32 %v2055, %v2311
        %v2376 = vmax.f32 %v2056, %v2312
        %v2377 = vmax.f32 %v2057, %v2313
        %v2378 = vmax.f32 %v2058, %v2314
        %v2379 = vmax.f32 %v2059, %v2315
        %v2380 = vmax.f32 %v2060, %v2316
        %v2381 = vmax.f32 %v2061, %v2317
        %v2382 = vmax.f32 %v2062, %v2318
        %v2383 = vmax.f32 %v2063, %v2319
        %v2448 = vperm.slane %v2320, 0
        %v2449 = vperm.slane %v2320, 2
        %v2450 = vperm.slane %v2320, 4
        %v2451 = vperm.slane %v2320, 6
        %v2452 = vperm.slane %v2321, 0
        %v2453 = vperm.slane %v2321, 2
        %v2454 = vperm.slane %v2321, 4
        %v2455 = vperm.slane %v2321, 6
        %v2456 = vperm.slane %v2322, 0
        %v2457 = vperm.slane %v2322, 2
        %v2458 = vperm.slane %v2322, 4
        %v2459 = vperm.slane %v2322, 6
        %v2460 = vperm.slane %v2323, 0
        %v2461 = vperm.slane %v2323, 2
        %v2462 = vperm.slane %v2323, 4
        %v2463 = vperm.slane %v2323, 6
        %v2464 = vperm.slane %v2324, 0
        %v2465 = vperm.slane %v2324, 2
        %v2466 = vperm.slane %v2324, 4
        %v2467 = vperm.slane %v2324, 6
        %v2468 = vperm.slane %v2325, 0
        %v2469 = vperm.slane %v2325, 2
        %v2470 = vperm.slane %v2325, 4
        %v2471 = vperm.slane %v2325, 6
        %v2472 = vperm.slane %v2326, 0
        %v2473 = vperm.slane %v2326, 2
        %v2474 = vperm.slane %v2326, 4
        %v2475 = vperm.slane %v2326, 6
        %v2476 = vperm.slane %v2327, 0
        %v2477 = vperm.slane %v2327, 2
        %v2478 = vperm.slane %v2327, 4
        %v2479 = vperm.slane %v2327, 6
        %v2480 = vperm.slane %v2328, 0
        %v2481 = vperm.slane %v2328, 2
        %v2482 = vperm.slane %v2328, 4
        %v2483 = vperm.slane %v2328, 6
        %v2484 = vperm.slane %v2329, 0
        %v2485 = vperm.slane %v2329, 2
        %v2486 = vperm.slane %v2329, 4
        %v2487 = vperm.slane %v2329, 6
        %v2488 = vperm.slane %v2330, 0
        %v2489 = vperm.slane %v2330, 2
        %v2490 = vperm.slane %v2330, 4
        %v2491 = vperm.slane %v2330, 6
        %v2492 = vperm.slane %v2331, 0
        %v2493 = vperm.slane %v2331, 2
        %v2494 = vperm.slane %v2331, 4
        %v2495 = vperm.slane %v2331, 6
        %v2496 = vperm.slane %v2332, 0
        %v2497 = vperm.slane %v2332, 2
        %v2498 = vperm.slane %v2332, 4
        %v2499 = vperm.slane %v2332, 6
        %v2500 = vperm.slane %v2333, 0
        %v2501 = vperm.slane %v2333, 2
        %v2502 = vperm.slane %v2333, 4
        %v2503 = vperm.slane %v2333, 6
        %v2504 = vperm.slane %v2334, 0
        %v2505 = vperm.slane %v2334, 2
        %v2506 = vperm.slane %v2334, 4
        %v2507 = vperm.slane %v2334, 6
        %v2508 = vperm.slane %v2335, 0
        %v2509 = vperm.slane %v2335, 2
        %v2510 = vperm.slane %v2335, 4
        %v2511 = vperm.slane %v2335, 6
        %v2512 = vperm.slane %v2336, 0
        %v2513 = vperm.slane %v2336, 2
        %v2514 = vperm.slane %v2336, 4
        %v2515 = vperm.slane %v2336, 6
        %v2516 = vperm.slane %v2337, 0
        %v2517 = vperm.slane %v2337, 2
        %v2518 = vperm.slane %v2337, 4
        %v2519 = vperm.slane %v2337, 6
        %v2520 = vperm.slane %v2338, 0
        %v2521 = vperm.slane %v2338, 2
        %v2522 = vperm.slane %v2338, 4
        %v2523 = vperm.slane %v2338, 6
        %v2524 = vperm.slane %v2339, 0
        %v2525 = vperm.slane %v2339, 2
        %v2526 = vperm.slane %v2339, 4
        %v2527 = vperm.slane %v2339, 6
        %v2528 = vperm.slane %v2340, 0
        %v2529 = vperm.slane %v2340, 2
        %v2530 = vperm.slane %v2340, 4
        %v2531 = vperm.slane %v2340, 6
        %v2532 = vperm.slane %v2341, 0
        %v2533 = vperm.slane %v2341, 2
        %v2534 = vperm.slane %v2341, 4
        %v2535 = vperm.slane %v2341, 6
        %v2536 = vperm.slane %v2342, 0
        %v2537 = vperm.slane %v2342, 2
        %v2538 = vperm.slane %v2342, 4
        %v2539 = vperm.slane %v2342, 6
        %v2540 = vperm.slane %v2343, 0
        %v2541 = vperm.slane %v2343, 2
        %v2542 = vperm.slane %v2343, 4
        %v2543 = vperm.slane %v2343, 6
        %v2544 = vperm.slane %v2344, 0
        %v2545 = vperm.slane %v2344, 2
        %v2546 = vperm.slane %v2344, 4
        %v2547 = vperm.slane %v2344, 6
        %v2548 = vperm.slane %v2345, 0
        %v2549 = vperm.slane %v2345, 2
        %v2550 = vperm.slane %v2345, 4
        %v2551 = vperm.slane %v2345, 6
        %v2552 = vperm.slane %v2346, 0
        %v2553 = vperm.slane %v2346, 2
        %v2554 = vperm.slane %v2346, 4
        %v2555 = vperm.slane %v2346, 6
        %v2556 = vperm.slane %v2347, 0
        %v2557 = vperm.slane %v2347, 2
        %v2558 = vperm.slane %v2347, 4
        %v2559 = vperm.slane %v2347, 6
        %v2560 = vperm.slane %v2348, 0
        %v2561 = vperm.slane %v2348, 2
        %v2562 = vperm.slane %v2348, 4
        %v2563 = vperm.slane %v2348, 6
        %v2564 = vperm.slane %v2349, 0
        %v2565 = vperm.slane %v2349, 2
        %v2566 = vperm.slane %v2349, 4
        %v2567 = vperm.slane %v2349, 6
        %v2568 = vperm.slane %v2350, 0
        %v2569 = vperm.slane %v2350, 2
        %v2570 = vperm.slane %v2350, 4
        %v2571 = vperm.slane %v2350, 6
        %v2572 = vperm.slane %v2351, 0
        %v2573 = vperm.slane %v2351, 2
        %v2574 = vperm.slane %v2351, 4
        %v2575 = vperm.slane %v2351, 6
        %v2576 = vperm.slane %v2352, 0
        %v2577 = vperm.slane %v2352, 2
        %v2578 = vperm.slane %v2352, 4
        %v2579 = vperm.slane %v2352, 6
        %v2580 = vperm.slane %v2353, 0
        %v2581 = vperm.slane %v2353, 2
        %v2582 = vperm.slane %v2353, 4
        %v2583 = vperm.slane %v2353, 6
        %v2584 = vperm.slane %v2354, 0
        %v2585 = vperm.slane %v2354, 2
        %v2586 = vperm.slane %v2354, 4
        %v2587 = vperm.slane %v2354, 6
        %v2588 = vperm.slane %v2355, 0
        %v2589 = vperm.slane %v2355, 2
        %v2590 = vperm.slane %v2355, 4
        %v2591 = vperm.slane %v2355, 6
        %v2592 = vperm.slane %v2356, 0
        %v2593 = vperm.slane %v2356, 2
        %v2594 = vperm.slane %v2356, 4
        %v2595 = vperm.slane %v2356, 6
        %v2596 = vperm.slane %v2357, 0
        %v2597 = vperm.slane %v2357, 2
        %v2598 = vperm.slane %v2357, 4
        %v2599 = vperm.slane %v2357, 6
        %v2600 = vperm.slane %v2358, 0
        %v2601 = vperm.slane %v2358, 2
        %v2602 = vperm.slane %v2358, 4
        %v2603 = vperm.slane %v2358, 6
        %v2604 = vperm.slane %v2359, 0
        %v2605 = vperm.slane %v2359, 2
        %v2606 = vperm.slane %v2359, 4
        %v2607 = vperm.slane %v2359, 6
        %v2608 = vperm.slane %v2360, 0
        %v2609 = vperm.slane %v2360, 2
        %v2610 = vperm.slane %v2360, 4
        %v2611 = vperm.slane %v2360, 6
        %v2612 = vperm.slane %v2361, 0
        %v2613 = vperm.slane %v2361, 2
        %v2614 = vperm.slane %v2361, 4
        %v2615 = vperm.slane %v2361, 6
        %v2616 = vperm.slane %v2362, 0
        %v2617 = vperm.slane %v2362, 2
        %v2618 = vperm.slane %v2362, 4
        %v2619 = vperm.slane %v2362, 6
        %v2620 = vperm.slane %v2363, 0
        %v2621 = vperm.slane %v2363, 2
        %v2622 = vperm.slane %v2363, 4
        %v2623 = vperm.slane %v2363, 6
        %v2624 = vperm.slane %v2364, 0
        %v2625 = vperm.slane %v2364, 2
        %v2626 = vperm.slane %v2364, 4
        %v2627 = vperm.slane %v2364, 6
        %v2628 = vperm.slane %v2365, 0
        %v2629 = vperm.slane %v2365, 2
        %v2630 = vperm.slane %v2365, 4
        %v2631 = vperm.slane %v2365, 6
        %v2632 = vperm.slane %v2366, 0
        %v2633 = vperm.slane %v2366, 2
        %v2634 = vperm.slane %v2366, 4
        %v2635 = vperm.slane %v2366, 6
        %v2636 = vperm.slane %v2367, 0
        %v2637 = vperm.slane %v2367, 2
        %v2638 = vperm.slane %v2367, 4
        %v2639 = vperm.slane %v2367, 6
        %v2640 = vperm.slane %v2368, 0
        %v2641 = vperm.slane %v2368, 2
        %v2642 = vperm.slane %v2368, 4
        %v2643 = vperm.slane %v2368, 6
        %v2644 = vperm.slane %v2369, 0
        %v2645 = vperm.slane %v2369, 2
        %v2646 = vperm.slane %v2369, 4
        %v2647 = vperm.slane %v2369, 6
        %v2648 = vperm.slane %v2370, 0
        %v2649 = vperm.slane %v2370, 2
        %v2650 = vperm.slane %v2370, 4
        %v2651 = vperm.slane %v2370, 6
        %v2652 = vperm.slane %v2371, 0
        %v2653 = vperm.slane %v2371, 2
        %v2654 = vperm.slane %v2371, 4
        %v2655 = vperm.slane %v2371, 6
        %v2656 = vperm.slane %v2372, 0
        %v2657 = vperm.slane %v2372, 2
        %v2658 = vperm.slane %v2372, 4
        %v2659 = vperm.slane %v2372, 6
        %v2660 = vperm.slane %v2373, 0
        %v2661 = vperm.slane %v2373, 2
        %v2662 = vperm.slane %v2373, 4
        %v2663 = vperm.slane %v2373, 6
        %v2664 = vperm.slane %v2374, 0
        %v2665 = vperm.slane %v2374, 2
        %v2666 = vperm.slane %v2374, 4
        %v2667 = vperm.slane %v2374, 6
        %v2668 = vperm.slane %v2375, 0
        %v2669 = vperm.slane %v2375, 2
        %v2670 = vperm.slane %v2375, 4
        %v2671 = vperm.slane %v2375, 6
        %v2672 = vperm.slane %v2376, 0
        %v2673 = vperm.slane %v2376, 2
        %v2674 = vperm.slane %v2376, 4
        %v2675 = vperm.slane %v2376, 6
        %v2676 = vperm.slane %v2377, 0
        %v2677 = vperm.slane %v2377, 2
        %v2678 = vperm.slane %v2377, 4
        %v2679 = vperm.slane %v2377, 6
        %v2680 = vperm.slane %v2378, 0
        %v2681 = vperm.slane %v2378, 2
        %v2682 = vperm.slane %v2378, 4
        %v2683 = vperm.slane %v2378, 6
        %v2684 = vperm.slane %v2379, 0
        %v2685 = vperm.slane %v2379, 2
        %v2686 = vperm.slane %v2379, 4
        %v2687 = vperm.slane %v2379, 6
        %v2688 = vperm.slane %v2380, 0
        %v2689 = vperm.slane %v2380, 2
        %v2690 = vperm.slane %v2380, 4
        %v2691 = vperm.slane %v2380, 6
        %v2692 = vperm.slane %v2381, 0
        %v2693 = vperm.slane %v2381, 2
        %v2694 = vperm.slane %v2381, 4
        %v2695 = vperm.slane %v2381, 6
        %v2696 = vperm.slane %v2382, 0
        %v2697 = vperm.slane %v2382, 2
        %v2698 = vperm.slane %v2382, 4
        %v2699 = vperm.slane %v2382, 6
        %v2700 = vperm.slane %v2383, 0
        %v2701 = vperm.slane %v2383, 2
        %v2702 = vperm.slane %v2383, 4
        %v2703 = vperm.slane %v2383, 6
        %v2960 = vpack.c.bf16 %v2449, %v2448
        %v2961 = vpack.c.bf16 %v2451, %v2450
        %v2962 = vpack.c.bf16 %v2453, %v2452
        %v2963 = vpack.c.bf16 %v2455, %v2454
        %v2964 = vpack.c.bf16 %v2457, %v2456
        %v2965 = vpack.c.bf16 %v2459, %v2458
        %v2966 = vpack.c.bf16 %v2461, %v2460
        %v2967 = vpack.c.bf16 %v2463, %v2462
        %v2968 = vpack.c.bf16 %v2465, %v2464
        %v2969 = vpack.c.bf16 %v2467, %v2466
        %v2970 = vpack.c.bf16 %v2469, %v2468
        %v2971 = vpack.c.bf16 %v2471, %v2470
        %v2972 = vpack.c.bf16 %v2473, %v2472
        %v2973 = vpack.c.bf16 %v2475, %v2474
        %v2974 = vpack.c.bf16 %v2477, %v2476
        %v2975 = vpack.c.bf16 %v2479, %v2478
        %v2976 = vpack.c.bf16 %v2481, %v2480
        %v2977 = vpack.c.bf16 %v2483, %v2482
        %v2978 = vpack.c.bf16 %v2485, %v2484
        %v2979 = vpack.c.bf16 %v2487, %v2486
        %v2980 = vpack.c.bf16 %v2489, %v2488
        %v2981 = vpack.c.bf16 %v2491, %v2490
        %v2982 = vpack.c.bf16 %v2493, %v2492
        %v2983 = vpack.c.bf16 %v2495, %v2494
        %v2984 = vpack.c.bf16 %v2497, %v2496
        %v2985 = vpack.c.bf16 %v2499, %v2498
        %v2986 = vpack.c.bf16 %v2501, %v2500
        %v2987 = vpack.c.bf16 %v2503, %v2502
        %v2988 = vpack.c.bf16 %v2505, %v2504
        %v2989 = vpack.c.bf16 %v2507, %v2506
        %v2990 = vpack.c.bf16 %v2509, %v2508
        %v2991 = vpack.c.bf16 %v2511, %v2510
        %v2992 = vpack.c.bf16 %v2513, %v2512
        %v2993 = vpack.c.bf16 %v2515, %v2514
        %v2994 = vpack.c.bf16 %v2517, %v2516
        %v2995 = vpack.c.bf16 %v2519, %v2518
        %v2996 = vpack.c.bf16 %v2521, %v2520
        %v2997 = vpack.c.bf16 %v2523, %v2522
        %v2998 = vpack.c.bf16 %v2525, %v2524
        %v2999 = vpack.c.bf16 %v2527, %v2526
        %v3000 = vpack.c.bf16 %v2529, %v2528
        %v3001 = vpack.c.bf16 %v2531, %v2530
        %v3002 = vpack.c.bf16 %v2533, %v2532
        %v3003 = vpack.c.bf16 %v2535, %v2534
        %v3004 = vpack.c.bf16 %v2537, %v2536
        %v3005 = vpack.c.bf16 %v2539, %v2538
        %v3006 = vpack.c.bf16 %v2541, %v2540
        %v3007 = vpack.c.bf16 %v2543, %v2542
        %v3008 = vpack.c.bf16 %v2545, %v2544
        %v3009 = vpack.c.bf16 %v2547, %v2546
        %v3010 = vpack.c.bf16 %v2549, %v2548
        %v3011 = vpack.c.bf16 %v2551, %v2550
        %v3012 = vpack.c.bf16 %v2553, %v2552
        %v3013 = vpack.c.bf16 %v2555, %v2554
        %v3014 = vpack.c.bf16 %v2557, %v2556
        %v3015 = vpack.c.bf16 %v2559, %v2558
        %v3016 = vpack.c.bf16 %v2561, %v2560
        %v3017 = vpack.c.bf16 %v2563, %v2562
        %v3018 = vpack.c.bf16 %v2565, %v2564
        %v3019 = vpack.c.bf16 %v2567, %v2566
        %v3020 = vpack.c.bf16 %v2569, %v2568
        %v3021 = vpack.c.bf16 %v2571, %v2570
        %v3022 = vpack.c.bf16 %v2573, %v2572
        %v3023 = vpack.c.bf16 %v2575, %v2574
        %v3024 = vpack.c.bf16 %v2577, %v2576
        %v3025 = vpack.c.bf16 %v2579, %v2578
        %v3026 = vpack.c.bf16 %v2581, %v2580
        %v3027 = vpack.c.bf16 %v2583, %v2582
        %v3028 = vpack.c.bf16 %v2585, %v2584
        %v3029 = vpack.c.bf16 %v2587, %v2586
        %v3030 = vpack.c.bf16 %v2589, %v2588
        %v3031 = vpack.c.bf16 %v2591, %v2590
        %v3032 = vpack.c.bf16 %v2593, %v2592
        %v3033 = vpack.c.bf16 %v2595, %v2594
        %v3034 = vpack.c.bf16 %v2597, %v2596
        %v3035 = vpack.c.bf16 %v2599, %v2598
        %v3036 = vpack.c.bf16 %v2601, %v2600
        %v3037 = vpack.c.bf16 %v2603, %v2602
        %v3038 = vpack.c.bf16 %v2605, %v2604
        %v3039 = vpack.c.bf16 %v2607, %v2606
        %v3040 = vpack.c.bf16 %v2609, %v2608
        %v3041 = vpack.c.bf16 %v2611, %v2610
        %v3042 = vpack.c.bf16 %v2613, %v2612
        %v3043 = vpack.c.bf16 %v2615, %v2614
        %v3044 = vpack.c.bf16 %v2617, %v2616
        %v3045 = vpack.c.bf16 %v2619, %v2618
        %v3046 = vpack.c.bf16 %v2621, %v2620
        %v3047 = vpack.c.bf16 %v2623, %v2622
        %v3048 = vpack.c.bf16 %v2625, %v2624
        %v3049 = vpack.c.bf16 %v2627, %v2626
        %v3050 = vpack.c.bf16 %v2629, %v2628
        %v3051 = vpack.c.bf16 %v2631, %v2630
        %v3052 = vpack.c.bf16 %v2633, %v2632
        %v3053 = vpack.c.bf16 %v2635, %v2634
        %v3054 = vpack.c.bf16 %v2637, %v2636
        %v3055 = vpack.c.bf16 %v2639, %v2638
        %v3056 = vpack.c.bf16 %v2641, %v2640
        %v3057 = vpack.c.bf16 %v2643, %v2642
        %v3058 = vpack.c.bf16 %v2645, %v2644
        %v3059 = vpack.c.bf16 %v2647, %v2646
        %v3060 = vpack.c.bf16 %v2649, %v2648
        %v3061 = vpack.c.bf16 %v2651, %v2650
        %v3062 = vpack.c.bf16 %v2653, %v2652
        %v3063 = vpack.c.bf16 %v2655, %v2654
        %v3064 = vpack.c.bf16 %v2657, %v2656
        %v3065 = vpack.c.bf16 %v2659, %v2658
        %v3066 = vpack.c.bf16 %v2661, %v2660
        %v3067 = vpack.c.bf16 %v2663, %v2662
        %v3068 = vpack.c.bf16 %v2665, %v2664
        %v3069 = vpack.c.bf16 %v2667, %v2666
        %v3070 = vpack.c.bf16 %v2669, %v2668
        %v3071 = vpack.c.bf16 %v2671, %v2670
        %v3072 = vpack.c.bf16 %v2673, %v2672
        %v3073 = vpack.c.bf16 %v2675, %v2674
        %v3074 = vpack.c.bf16 %v2677, %v2676
        %v3075 = vpack.c.bf16 %v2679, %v2678
        %v3076 = vpack.c.bf16 %v2681, %v2680
        %v3077 = vpack.c.bf16 %v2683, %v2682
        %v3078 = vpack.c.bf16 %v2685, %v2684
        %v3079 = vpack.c.bf16 %v2687, %v2686
        %v3080 = vpack.c.bf16 %v2689, %v2688
        %v3081 = vpack.c.bf16 %v2691, %v2690
        %v3082 = vpack.c.bf16 %v2693, %v2692
        %v3083 = vpack.c.bf16 %v2695, %v2694
        %v3084 = vpack.c.bf16 %v2697, %v2696
        %v3085 = vpack.c.bf16 %v2699, %v2698
        %v3086 = vpack.c.bf16 %v2701, %v2700
        %v3087 = vpack.c.bf16 %v2703, %v2702
        %v3216 = vunpack.c.l.b16 %v2960
        %v3217 = vunpack.c.h.b16 %v2960
        %v3218 = vunpack.c.l.b16 %v2961
        %v3219 = vunpack.c.h.b16 %v2961
        %v3220 = vunpack.c.l.b16 %v2962
        %v3221 = vunpack.c.h.b16 %v2962
        %v3222 = vunpack.c.l.b16 %v2963
        %v3223 = vunpack.c.h.b16 %v2963
        %v3224 = vunpack.c.l.b16 %v2964
        %v3225 = vunpack.c.h.b16 %v2964
        %v3226 = vunpack.c.l.b16 %v2965
        %v3227 = vunpack.c.h.b16 %v2965
        %v3228 = vunpack.c.l.b16 %v2966
        %v3229 = vunpack.c.h.b16 %v2966
        %v3230 = vunpack.c.l.b16 %v2967
        %v3231 = vunpack.c.h.b16 %v2967
        %v3232 = vunpack.c.l.b16 %v2968
        %v3233 = vunpack.c.h.b16 %v2968
        %v3234 = vunpack.c.l.b16 %v2969
        %v3235 = vunpack.c.h.b16 %v2969
        %v3236 = vunpack.c.l.b16 %v2970
        %v3237 = vunpack.c.h.b16 %v2970
        %v3238 = vunpack.c.l.b16 %v2971
        %v3239 = vunpack.c.h.b16 %v2971
        %v3240 = vunpack.c.l.b16 %v2972
        %v3241 = vunpack.c.h.b16 %v2972
        %v3242 = vunpack.c.l.b16 %v2973
        %v3243 = vunpack.c.h.b16 %v2973
        %v3244 = vunpack.c.l.b16 %v2974
        %v3245 = vunpack.c.h.b16 %v2974
        %v3246 = vunpack.c.l.b16 %v2975
        %v3247 = vunpack.c.h.b16 %v2975
        %v3248 = vunpack.c.l.b16 %v2976
        %v3249 = vunpack.c.h.b16 %v2976
        %v3250 = vunpack.c.l.b16 %v2977
        %v3251 = vunpack.c.h.b16 %v2977
        %v3252 = vunpack.c.l.b16 %v2978
        %v3253 = vunpack.c.h.b16 %v2978
        %v3254 = vunpack.c.l.b16 %v2979
        %v3255 = vunpack.c.h.b16 %v2979
        %v3256 = vunpack.c.l.b16 %v2980
        %v3257 = vunpack.c.h.b16 %v2980
        %v3258 = vunpack.c.l.b16 %v2981
        %v3259 = vunpack.c.h.b16 %v2981
        %v3260 = vunpack.c.l.b16 %v2982
        %v3261 = vunpack.c.h.b16 %v2982
        %v3262 = vunpack.c.l.b16 %v2983
        %v3263 = vunpack.c.h.b16 %v2983
        %v3264 = vunpack.c.l.b16 %v2984
        %v3265 = vunpack.c.h.b16 %v2984
        %v3266 = vunpack.c.l.b16 %v2985
        %v3267 = vunpack.c.h.b16 %v2985
        %v3268 = vunpack.c.l.b16 %v2986
        %v3269 = vunpack.c.h.b16 %v2986
        %v3270 = vunpack.c.l.b16 %v2987
        %v3271 = vunpack.c.h.b16 %v2987
        %v3272 = vunpack.c.l.b16 %v2988
        %v3273 = vunpack.c.h.b16 %v2988
        %v3274 = vunpack.c.l.b16 %v2989
        %v3275 = vunpack.c.h.b16 %v2989
        %v3276 = vunpack.c.l.b16 %v2990
        %v3277 = vunpack.c.h.b16 %v2990
        %v3278 = vunpack.c.l.b16 %v2991
        %v3279 = vunpack.c.h.b16 %v2991
        %v3280 = vunpack.c.l.b16 %v2992
        %v3281 = vunpack.c.h.b16 %v2992
        %v3282 = vunpack.c.l.b16 %v2993
        %v3283 = vunpack.c.h.b16 %v2993
        %v3284 = vunpack.c.l.b16 %v2994
        %v3285 = vunpack.c.h.b16 %v2994
        %v3286 = vunpack.c.l.b16 %v2995
        %v3287 = vunpack.c.h.b16 %v2995
        %v3288 = vunpack.c.l.b16 %v2996
        %v3289 = vunpack.c.h.b16 %v2996
        %v3290 = vunpack.c.l.b16 %v2997
        %v3291 = vunpack.c.h.b16 %v2997
        %v3292 = vunpack.c.l.b16 %v2998
        %v3293 = vunpack.c.h.b16 %v2998
        %v3294 = vunpack.c.l.b16 %v2999
        %v3295 = vunpack.c.h.b16 %v2999
        %v3296 = vunpack.c.l.b16 %v3000
        %v3297 = vunpack.c.h.b16 %v3000
        %v3298 = vunpack.c.l.b16 %v3001
        %v3299 = vunpack.c.h.b16 %v3001
        %v3300 = vunpack.c.l.b16 %v3002
        %v3301 = vunpack.c.h.b16 %v3002
        %v3302 = vunpack.c.l.b16 %v3003
        %v3303 = vunpack.c.h.b16 %v3003
        %v3304 = vunpack.c.l.b16 %v3004
        %v3305 = vunpack.c.h.b16 %v3004
        %v3306 = vunpack.c.l.b16 %v3005
        %v3307 = vunpack.c.h.b16 %v3005
        %v3308 = vunpack.c.l.b16 %v3006
        %v3309 = vunpack.c.h.b16 %v3006
        %v3310 = vunpack.c.l.b16 %v3007
        %v3311 = vunpack.c.h.b16 %v3007
        %v3312 = vunpack.c.l.b16 %v3008
        %v3313 = vunpack.c.h.b16 %v3008
        %v3314 = vunpack.c.l.b16 %v3009
        %v3315 = vunpack.c.h.b16 %v3009
        %v3316 = vunpack.c.l.b16 %v3010
        %v3317 = vunpack.c.h.b16 %v3010
        %v3318 = vunpack.c.l.b16 %v3011
        %v3319 = vunpack.c.h.b16 %v3011
        %v3320 = vunpack.c.l.b16 %v3012
        %v3321 = vunpack.c.h.b16 %v3012
        %v3322 = vunpack.c.l.b16 %v3013
        %v3323 = vunpack.c.h.b16 %v3013
        %v3324 = vunpack.c.l.b16 %v3014
        %v3325 = vunpack.c.h.b16 %v3014
        %v3326 = vunpack.c.l.b16 %v3015
        %v3327 = vunpack.c.h.b16 %v3015
        %v3328 = vunpack.c.l.b16 %v3016
        %v3329 = vunpack.c.h.b16 %v3016
        %v3330 = vunpack.c.l.b16 %v3017
        %v3331 = vunpack.c.h.b16 %v3017
        %v3332 = vunpack.c.l.b16 %v3018
        %v3333 = vunpack.c.h.b16 %v3018
        %v3334 = vunpack.c.l.b16 %v3019
        %v3335 = vunpack.c.h.b16 %v3019
        %v3336 = vunpack.c.l.b16 %v3020
        %v3337 = vunpack.c.h.b16 %v3020
        %v3338 = vunpack.c.l.b16 %v3021
        %v3339 = vunpack.c.h.b16 %v3021
        %v3340 = vunpack.c.l.b16 %v3022
        %v3341 = vunpack.c.h.b16 %v3022
        %v3342 = vunpack.c.l.b16 %v3023
        %v3343 = vunpack.c.h.b16 %v3023
        %v3344 = vunpack.c.l.b16 %v3024
        %v3345 = vunpack.c.h.b16 %v3024
        %v3346 = vunpack.c.l.b16 %v3025
        %v3347 = vunpack.c.h.b16 %v3025
        %v3348 = vunpack.c.l.b16 %v3026
        %v3349 = vunpack.c.h.b16 %v3026
        %v3350 = vunpack.c.l.b16 %v3027
        %v3351 = vunpack.c.h.b16 %v3027
        %v3352 = vunpack.c.l.b16 %v3028
        %v3353 = vunpack.c.h.b16 %v3028
        %v3354 = vunpack.c.l.b16 %v3029
        %v3355 = vunpack.c.h.b16 %v3029
        %v3356 = vunpack.c.l.b16 %v3030
        %v3357 = vunpack.c.h.b16 %v3030
        %v3358 = vunpack.c.l.b16 %v3031
        %v3359 = vunpack.c.h.b16 %v3031
        %v3360 = vunpack.c.l.b16 %v3032
        %v3361 = vunpack.c.h.b16 %v3032
        %v3362 = vunpack.c.l.b16 %v3033
        %v3363 = vunpack.c.h.b16 %v3033
        %v3364 = vunpack.c.l.b16 %v3034
        %v3365 = vunpack.c.h.b16 %v3034
        %v3366 = vunpack.c.l.b16 %v3035
        %v3367 = vunpack.c.h.b16 %v3035
        %v3368 = vunpack.c.l.b16 %v3036
        %v3369 = vunpack.c.h.b16 %v3036
        %v3370 = vunpack.c.l.b16 %v3037
        %v3371 = vunpack.c.h.b16 %v3037
        %v3372 = vunpack.c.l.b16 %v3038
        %v3373 = vunpack.c.h.b16 %v3038
        %v3374 = vunpack.c.l.b16 %v3039
        %v3375 = vunpack.c.h.b16 %v3039
        %v3376 = vunpack.c.l.b16 %v3040
        %v3377 = vunpack.c.h.b16 %v3040
        %v3378 = vunpack.c.l.b16 %v3041
        %v3379 = vunpack.c.h.b16 %v3041
        %v3380 = vunpack.c.l.b16 %v3042
        %v3381 = vunpack.c.h.b16 %v3042
        %v3382 = vunpack.c.l.b16 %v3043
        %v3383 = vunpack.c.h.b16 %v3043
        %v3384 = vunpack.c.l.b16 %v3044
        %v3385 = vunpack.c.h.b16 %v3044
        %v3386 = vunpack.c.l.b16 %v3045
        %v3387 = vunpack.c.h.b16 %v3045
        %v3388 = vunpack.c.l.b16 %v3046
        %v3389 = vunpack.c.h.b16 %v3046
        %v3390 = vunpack.c.l.b16 %v3047
        %v3391 = vunpack.c.h.b16 %v3047
        %v3392 = vunpack.c.l.b16 %v3048
        %v3393 = vunpack.c.h.b16 %v3048
        %v3394 = vunpack.c.l.b16 %v3049
        %v3395 = vunpack.c.h.b16 %v3049
        %v3396 = vunpack.c.l.b16 %v3050
        %v3397 = vunpack.c.h.b16 %v3050
        %v3398 = vunpack.c.l.b16 %v3051
        %v3399 = vunpack.c.h.b16 %v3051
        %v3400 = vunpack.c.l.b16 %v3052
        %v3401 = vunpack.c.h.b16 %v3052
        %v3402 = vunpack.c.l.b16 %v3053
        %v3403 = vunpack.c.h.b16 %v3053
        %v3404 = vunpack.c.l.b16 %v3054
        %v3405 = vunpack.c.h.b16 %v3054
        %v3406 = vunpack.c.l.b16 %v3055
        %v3407 = vunpack.c.h.b16 %v3055
        %v3408 = vunpack.c.l.b16 %v3056
        %v3409 = vunpack.c.h.b16 %v3056
        %v3410 = vunpack.c.l.b16 %v3057
        %v3411 = vunpack.c.h.b16 %v3057
        %v3412 = vunpack.c.l.b16 %v3058
        %v3413 = vunpack.c.h.b16 %v3058
        %v3414 = vunpack.c.l.b16 %v3059
        %v3415 = vunpack.c.h.b16 %v3059
        %v3416 = vunpack.c.l.b16 %v3060
        %v3417 = vunpack.c.h.b16 %v3060
        %v3418 = vunpack.c.l.b16 %v3061
        %v3419 = vunpack.c.h.b16 %v3061
        %v3420 = vunpack.c.l.b16 %v3062
        %v3421 = vunpack.c.h.b16 %v3062
        %v3422 = vunpack.c.l.b16 %v3063
        %v3423 = vunpack.c.h.b16 %v3063
        %v3424 = vunpack.c.l.b16 %v3064
        %v3425 = vunpack.c.h.b16 %v3064
        %v3426 = vunpack.c.l.b16 %v3065
        %v3427 = vunpack.c.h.b16 %v3065
        %v3428 = vunpack.c.l.b16 %v3066
        %v3429 = vunpack.c.h.b16 %v3066
        %v3430 = vunpack.c.l.b16 %v3067
        %v3431 = vunpack.c.h.b16 %v3067
        %v3432 = vunpack.c.l.b16 %v3068
        %v3433 = vunpack.c.h.b16 %v3068
        %v3434 = vunpack.c.l.b16 %v3069
        %v3435 = vunpack.c.h.b16 %v3069
        %v3436 = vunpack.c.l.b16 %v3070
        %v3437 = vunpack.c.h.b16 %v3070
        %v3438 = vunpack.c.l.b16 %v3071
        %v3439 = vunpack.c.h.b16 %v3071
        %v3440 = vunpack.c.l.b16 %v3072
        %v3441 = vunpack.c.h.b16 %v3072
        %v3442 = vunpack.c.l.b16 %v3073
        %v3443 = vunpack.c.h.b16 %v3073
        %v3444 = vunpack.c.l.b16 %v3074
        %v3445 = vunpack.c.h.b16 %v3074
        %v3446 = vunpack.c.l.b16 %v3075
        %v3447 = vunpack.c.h.b16 %v3075
        %v3448 = vunpack.c.l.b16 %v3076
        %v3449 = vunpack.c.h.b16 %v3076
        %v3450 = vunpack.c.l.b16 %v3077
        %v3451 = vunpack.c.h.b16 %v3077
        %v3452 = vunpack.c.l.b16 %v3078
        %v3453 = vunpack.c.h.b16 %v3078
        %v3454 = vunpack.c.l.b16 %v3079
        %v3455 = vunpack.c.h.b16 %v3079
        %v3456 = vunpack.c.l.b16 %v3080
        %v3457 = vunpack.c.h.b16 %v3080
        %v3458 = vunpack.c.l.b16 %v3081
        %v3459 = vunpack.c.h.b16 %v3081
        %v3460 = vunpack.c.l.b16 %v3082
        %v3461 = vunpack.c.h.b16 %v3082
        %v3462 = vunpack.c.l.b16 %v3083
        %v3463 = vunpack.c.h.b16 %v3083
        %v3464 = vunpack.c.l.b16 %v3084
        %v3465 = vunpack.c.h.b16 %v3084
        %v3466 = vunpack.c.l.b16 %v3085
        %v3467 = vunpack.c.h.b16 %v3085
        %v3468 = vunpack.c.l.b16 %v3086
        %v3469 = vunpack.c.h.b16 %v3086
        %v3470 = vunpack.c.l.b16 %v3087
        %v3471 = vunpack.c.h.b16 %v3087
        %v3472 = vrot.slane %v3220, 7
        %vm3473 = vcmask 1041409
        %v3474 = vsel %vm3473, %v3472, %v3216
        %v3475 = vrot.slane %v3224, 6
        %vm3476 = vcmask 1042434
        %v3477 = vsel %vm3476, %v3475, %v3474
        %v3478 = vrot.slane %v3228, 5
        %vm3479 = vcmask 1043459
        %v3480 = vsel %vm3479, %v3478, %v3477
        %v3481 = vrot.slane %v3232, 4
        %vm3482 = vcmask 1044484
        %v3483 = vsel %vm3482, %v3481, %v3480
        %v3484 = vrot.slane %v3236, 3
        %vm3485 = vcmask 1045509
        %v3486 = vsel %vm3485, %v3484, %v3483
        %v3487 = vrot.slane %v3240, 2
        %vm3488 = vcmask 1046534
        %v3489 = vsel %vm3488, %v3487, %v3486
        %v3490 = vrot.slane %v3244, 1
        %vm3491 = vcmask 1047559
        %v3492 = vsel %vm3491, %v3490, %v3489
        %v3493 = vrot.slane %v3221, 7
        %v3494 = vsel %vm3473, %v3493, %v3217
        %v3495 = vrot.slane %v3225, 6
        %v3496 = vsel %vm3476, %v3495, %v3494
        %v3497 = vrot.slane %v3229, 5
        %v3498 = vsel %vm3479, %v3497, %v3496
        %v3499 = vrot.slane %v3233, 4
        %v3500 = vsel %vm3482, %v3499, %v3498
        %v3501 = vrot.slane %v3237, 3
        %v3502 = vsel %vm3485, %v3501, %v3500
        %v3503 = vrot.slane %v3241, 2
        %v3504 = vsel %vm3488, %v3503, %v3502
        %v3505 = vrot.slane %v3245, 1
        %v3506 = vsel %vm3491, %v3505, %v3504
        %v3507 = vrot.slane %v3222, 7
        %v3508 = vsel %vm3473, %v3507, %v3218
        %v3509 = vrot.slane %v3226, 6
        %v3510 = vsel %vm3476, %v3509, %v3508
        %v3511 = vrot.slane %v3230, 5
        %v3512 = vsel %vm3479, %v3511, %v3510
        %v3513 = vrot.slane %v3234, 4
        %v3514 = vsel %vm3482, %v3513, %v3512
        %v3515 = vrot.slane %v3238, 3
        %v3516 = vsel %vm3485, %v3515, %v3514
        %v3517 = vrot.slane %v3242, 2
        %v3518 = vsel %vm3488, %v3517, %v3516
        %v3519 = vrot.slane %v3246, 1
        %v3520 = vsel %vm3491, %v3519, %v3518
        %v3521 = vrot.slane %v3223, 7
        %v3522 = vsel %vm3473, %v3521, %v3219
        %v3523 = vrot.slane %v3227, 6
        %v3524 = vsel %vm3476, %v3523, %v3522
        %v3525 = vrot.slane %v3231, 5
        %v3526 = vsel %vm3479, %v3525, %v3524
        %v3527 = vrot.slane %v3235, 4
        %v3528 = vsel %vm3482, %v3527, %v3526
        %v3529 = vrot.slane %v3239, 3
        %v3530 = vsel %vm3485, %v3529, %v3528
        %v3531 = vrot.slane %v3243, 2
        %v3532 = vsel %vm3488, %v3531, %v3530
        %v3533 = vrot.slane %v3247, 1
        %v3534 = vsel %vm3491, %v3533, %v3532
        %v3535 = vrot.slane %v3252, 7
        %v3536 = vsel %vm3473, %v3535, %v3248
        %v3537 = vrot.slane %v3256, 6
        %v3538 = vsel %vm3476, %v3537, %v3536
        %v3539 = vrot.slane %v3260, 5
        %v3540 = vsel %vm3479, %v3539, %v3538
        %v3541 = vrot.slane %v3264, 4
        %v3542 = vsel %vm3482, %v3541, %v3540
        %v3543 = vrot.slane %v3268, 3
        %v3544 = vsel %vm3485, %v3543, %v3542
        %v3545 = vrot.slane %v3272, 2
        %v3546 = vsel %vm3488, %v3545, %v3544
        %v3547 = vrot.slane %v3276, 1
        %v3548 = vsel %vm3491, %v3547, %v3546
        %v3549 = vrot.slane %v3253, 7
        %v3550 = vsel %vm3473, %v3549, %v3249
        %v3551 = vrot.slane %v3257, 6
        %v3552 = vsel %vm3476, %v3551, %v3550
        %v3553 = vrot.slane %v3261, 5
        %v3554 = vsel %vm3479, %v3553, %v3552
        %v3555 = vrot.slane %v3265, 4
        %v3556 = vsel %vm3482, %v3555, %v3554
        %v3557 = vrot.slane %v3269, 3
        %v3558 = vsel %vm3485, %v3557, %v3556
        %v3559 = vrot.slane %v3273, 2
        %v3560 = vsel %vm3488, %v3559, %v3558
        %v3561 = vrot.slane %v3277, 1
        %v3562 = vsel %vm3491, %v3561, %v3560
        %v3563 = vrot.slane %v3254, 7
        %v3564 = vsel %vm3473, %v3563, %v3250
        %v3565 = vrot.slane %v3258, 6
        %v3566 = vsel %vm3476, %v3565, %v3564
        %v3567 = vrot.slane %v3262, 5
        %v3568 = vsel %vm3479, %v3567, %v3566
        %v3569 = vrot.slane %v3266, 4
        %v3570 = vsel %vm3482, %v3569, %v3568
        %v3571 = vrot.slane %v3270, 3
        %v3572 = vsel %vm3485, %v3571, %v3570
        %v3573 = vrot.slane %v3274, 2
        %v3574 = vsel %vm3488, %v3573, %v3572
        %v3575 = vrot.slane %v3278, 1
        %v3576 = vsel %vm3491, %v3575, %v3574
        %v3577 = vrot.slane %v3255, 7
        %v3578 = vsel %vm3473, %v3577, %v3251
        %v3579 = vrot.slane %v3259, 6
        %v3580 = vsel %vm3476, %v3579, %v3578
        %v3581 = vrot.slane %v3263, 5
        %v3582 = vsel %vm3479, %v3581, %v3580
        %v3583 = vrot.slane %v3267, 4
        %v3584 = vsel %vm3482, %v3583, %v3582
        %v3585 = vrot.slane %v3271, 3
        %v3586 = vsel %vm3485, %v3585, %v3584
        %v3587 = vrot.slane %v3275, 2
        %v3588 = vsel %vm3488, %v3587, %v3586
        %v3589 = vrot.slane %v3279, 1
        %v3590 = vsel %vm3491, %v3589, %v3588
        %v3591 = vrot.slane %v3284, 7
        %v3592 = vsel %vm3473, %v3591, %v3280
        %v3593 = vrot.slane %v3288, 6
        %v3594 = vsel %vm3476, %v3593, %v3592
        %v3595 = vrot.slane %v3292, 5
        %v3596 = vsel %vm3479, %v3595, %v3594
        %v3597 = vrot.slane %v3296, 4
        %v3598 = vsel %vm3482, %v3597, %v3596
        %v3599 = vrot.slane %v3300, 3
        %v3600 = vsel %vm3485, %v3599, %v3598
        %v3601 = vrot.slane %v3304, 2
        %v3602 = vsel %vm3488, %v3601, %v3600
        %v3603 = vrot.slane %v3308, 1
        %v3604 = vsel %vm3491, %v3603, %v3602
        %v3605 = vrot.slane %v3285, 7
        %v3606 = vsel %vm3473, %v3605, %v3281
        %v3607 = vrot.slane %v3289, 6
        %v3608 = vsel %vm3476, %v3607, %v3606
        %v3609 = vrot.slane %v3293, 5
        %v3610 = vsel %vm3479, %v3609, %v3608
        %v3611 = vrot.slane %v3297, 4
        %v3612 = vsel %vm3482, %v3611, %v3610
        %v3613 = vrot.slane %v3301, 3
        %v3614 = vsel %vm3485, %v3613, %v3612
        %v3615 = vrot.slane %v3305, 2
        %v3616 = vsel %vm3488, %v3615, %v3614
        %v3617 = vrot.slane %v3309, 1
        %v3618 = vsel %vm3491, %v3617, %v3616
        %v3619 = vrot.slane %v3286, 7
        %v3620 = vsel %vm3473, %v3619, %v3282
        %v3621 = vrot.slane %v3290, 6
        %v3622 = vsel %vm3476, %v3621, %v3620
        %v3623 = vrot.slane %v3294, 5
        %v3624 = vsel %vm3479, %v3623, %v3622
        %v3625 = vrot.slane %v3298, 4
        %v3626 = vsel %vm3482, %v3625, %v3624
        %v3627 = vrot.slane %v3302, 3
        %v3628 = vsel %vm3485, %v3627, %v3626
        %v3629 = vrot.slane %v3306, 2
        %v3630 = vsel %vm3488, %v3629, %v3628
        %v3631 = vrot.slane %v3310, 1
        %v3632 = vsel %vm3491, %v3631, %v3630
        %v3633 = vrot.slane %v3287, 7
        %v3634 = vsel %vm3473, %v3633, %v3283
        %v3635 = vrot.slane %v3291, 6
        %v3636 = vsel %vm3476, %v3635, %v3634
        %v3637 = vrot.slane %v3295, 5
        %v3638 = vsel %vm3479, %v3637, %v3636
        %v3639 = vrot.slane %v3299, 4
        %v3640 = vsel %vm3482, %v3639, %v3638
        %v3641 = vrot.slane %v3303, 3
        %v3642 = vsel %vm3485, %v3641, %v3640
        %v3643 = vrot.slane %v3307, 2
        %v3644 = vsel %vm3488, %v3643, %v3642
        %v3645 = vrot.slane %v3311, 1
        %v3646 = vsel %vm3491, %v3645, %v3644
        %v3647 = vrot.slane %v3316, 7
        %v3648 = vsel %vm3473, %v3647, %v3312
        %v3649 = vrot.slane %v3320, 6
        %v3650 = vsel %vm3476, %v3649, %v3648
        %v3651 = vrot.slane %v3324, 5
        %v3652 = vsel %vm3479, %v3651, %v3650
        %v3653 = vrot.slane %v3328, 4
        %v3654 = vsel %vm3482, %v3653, %v3652
        %v3655 = vrot.slane %v3332, 3
        %v3656 = vsel %vm3485, %v3655, %v3654
        %v3657 = vrot.slane %v3336, 2
        %v3658 = vsel %vm3488, %v3657, %v3656
        %v3659 = vrot.slane %v3340, 1
        %v3660 = vsel %vm3491, %v3659, %v3658
        %v3661 = vrot.slane %v3317, 7
        %v3662 = vsel %vm3473, %v3661, %v3313
        %v3663 = vrot.slane %v3321, 6
        %v3664 = vsel %vm3476, %v3663, %v3662
        %v3665 = vrot.slane %v3325, 5
        %v3666 = vsel %vm3479, %v3665, %v3664
        %v3667 = vrot.slane %v3329, 4
        %v3668 = vsel %vm3482, %v3667, %v3666
        %v3669 = vrot.slane %v3333, 3
        %v3670 = vsel %vm3485, %v3669, %v3668
        %v3671 = vrot.slane %v3337, 2
        %v3672 = vsel %vm3488, %v3671, %v3670
        %v3673 = vrot.slane %v3341, 1
        %v3674 = vsel %vm3491, %v3673, %v3672
        %v3675 = vrot.slane %v3318, 7
        %v3676 = vsel %vm3473, %v3675, %v3314
        %v3677 = vrot.slane %v3322, 6
        %v3678 = vsel %vm3476, %v3677, %v3676
        %v3679 = vrot.slane %v3326, 5
        %v3680 = vsel %vm3479, %v3679, %v3678
        %v3681 = vrot.slane %v3330, 4
        %v3682 = vsel %vm3482, %v3681, %v3680
        %v3683 = vrot.slane %v3334, 3
        %v3684 = vsel %vm3485, %v3683, %v3682
        %v3685 = vrot.slane %v3338, 2
        %v3686 = vsel %vm3488, %v3685, %v3684
        %v3687 = vrot.slane %v3342, 1
        %v3688 = vsel %vm3491, %v3687, %v3686
        %v3689 = vrot.slane %v3319, 7
        %v3690 = vsel %vm3473, %v3689, %v3315
        %v3691 = vrot.slane %v3323, 6
        %v3692 = vsel %vm3476, %v3691, %v3690
        %v3693 = vrot.slane %v3327, 5
        %v3694 = vsel %vm3479, %v3693, %v3692
        %v3695 = vrot.slane %v3331, 4
        %v3696 = vsel %vm3482, %v3695, %v3694
        %v3697 = vrot.slane %v3335, 3
        %v3698 = vsel %vm3485, %v3697, %v3696
        %v3699 = vrot.slane %v3339, 2
        %v3700 = vsel %vm3488, %v3699, %v3698
        %v3701 = vrot.slane %v3343, 1
        %v3702 = vsel %vm3491, %v3701, %v3700
        %v3703 = vrot.slane %v3348, 7
        %v3704 = vsel %vm3473, %v3703, %v3344
        %v3705 = vrot.slane %v3352, 6
        %v3706 = vsel %vm3476, %v3705, %v3704
        %v3707 = vrot.slane %v3356, 5
        %v3708 = vsel %vm3479, %v3707, %v3706
        %v3709 = vrot.slane %v3360, 4
        %v3710 = vsel %vm3482, %v3709, %v3708
        %v3711 = vrot.slane %v3364, 3
        %v3712 = vsel %vm3485, %v3711, %v3710
        %v3713 = vrot.slane %v3368, 2
        %v3714 = vsel %vm3488, %v3713, %v3712
        %v3715 = vrot.slane %v3372, 1
        %v3716 = vsel %vm3491, %v3715, %v3714
        %v3717 = vrot.slane %v3349, 7
        %v3718 = vsel %vm3473, %v3717, %v3345
        %v3719 = vrot.slane %v3353, 6
        %v3720 = vsel %vm3476, %v3719, %v3718
        %v3721 = vrot.slane %v3357, 5
        %v3722 = vsel %vm3479, %v3721, %v3720
        %v3723 = vrot.slane %v3361, 4
        %v3724 = vsel %vm3482, %v3723, %v3722
        %v3725 = vrot.slane %v3365, 3
        %v3726 = vsel %vm3485, %v3725, %v3724
        %v3727 = vrot.slane %v3369, 2
        %v3728 = vsel %vm3488, %v3727, %v3726
        %v3729 = vrot.slane %v3373, 1
        %v3730 = vsel %vm3491, %v3729, %v3728
        %v3731 = vrot.slane %v3350, 7
        %v3732 = vsel %vm3473, %v3731, %v3346
        %v3733 = vrot.slane %v3354, 6
        %v3734 = vsel %vm3476, %v3733, %v3732
        %v3735 = vrot.slane %v3358, 5
        %v3736 = vsel %vm3479, %v3735, %v3734
        %v3737 = vrot.slane %v3362, 4
        %v3738 = vsel %vm3482, %v3737, %v3736
        %v3739 = vrot.slane %v3366, 3
        %v3740 = vsel %vm3485, %v3739, %v3738
        %v3741 = vrot.slane %v3370, 2
        %v3742 = vsel %vm3488, %v3741, %v3740
        %v3743 = vrot.slane %v3374, 1
        %v3744 = vsel %vm3491, %v3743, %v3742
        %v3745 = vrot.slane %v3351, 7
        %v3746 = vsel %vm3473, %v3745, %v3347
        %v3747 = vrot.slane %v3355, 6
        %v3748 = vsel %vm3476, %v3747, %v3746
        %v3749 = vrot.slane %v3359, 5
        %v3750 = vsel %vm3479, %v3749, %v3748
        %v3751 = vrot.slane %v3363, 4
        %v3752 = vsel %vm3482, %v3751, %v3750
        %v3753 = vrot.slane %v3367, 3
        %v3754 = vsel %vm3485, %v3753, %v3752
        %v3755 = vrot.slane %v3371, 2
        %v3756 = vsel %vm3488, %v3755, %v3754
        %v3757 = vrot.slane %v3375, 1
        %v3758 = vsel %vm3491, %v3757, %v3756
        %v3759 = vrot.slane %v3380, 7
        %v3760 = vsel %vm3473, %v3759, %v3376
        %v3761 = vrot.slane %v3384, 6
        %v3762 = vsel %vm3476, %v3761, %v3760
        %v3763 = vrot.slane %v3388, 5
        %v3764 = vsel %vm3479, %v3763, %v3762
        %v3765 = vrot.slane %v3392, 4
        %v3766 = vsel %vm3482, %v3765, %v3764
        %v3767 = vrot.slane %v3396, 3
        %v3768 = vsel %vm3485, %v3767, %v3766
        %v3769 = vrot.slane %v3400, 2
        %v3770 = vsel %vm3488, %v3769, %v3768
        %v3771 = vrot.slane %v3404, 1
        %v3772 = vsel %vm3491, %v3771, %v3770
        %v3773 = vrot.slane %v3381, 7
        %v3774 = vsel %vm3473, %v3773, %v3377
        %v3775 = vrot.slane %v3385, 6
        %v3776 = vsel %vm3476, %v3775, %v3774
        %v3777 = vrot.slane %v3389, 5
        %v3778 = vsel %vm3479, %v3777, %v3776
        %v3779 = vrot.slane %v3393, 4
        %v3780 = vsel %vm3482, %v3779, %v3778
        %v3781 = vrot.slane %v3397, 3
        %v3782 = vsel %vm3485, %v3781, %v3780
        %v3783 = vrot.slane %v3401, 2
        %v3784 = vsel %vm3488, %v3783, %v3782
        %v3785 = vrot.slane %v3405, 1
        %v3786 = vsel %vm3491, %v3785, %v3784
        %v3787 = vrot.slane %v3382, 7
        %v3788 = vsel %vm3473, %v3787, %v3378
        %v3789 = vrot.slane %v3386, 6
        %v3790 = vsel %vm3476, %v3789, %v3788
        %v3791 = vrot.slane %v3390, 5
        %v3792 = vsel %vm3479, %v3791, %v3790
        %v3793 = vrot.slane %v3394, 4
        %v3794 = vsel %vm3482, %v3793, %v3792
        %v3795 = vrot.slane %v3398, 3
        %v3796 = vsel %vm3485, %v3795, %v3794
        %v3797 = vrot.slane %v3402, 2
        %v3798 = vsel %vm3488, %v3797, %v3796
        %v3799 = vrot.slane %v3406, 1
        %v3800 = vsel %vm3491, %v3799, %v3798
        %v3801 = vrot.slane %v3383, 7
        %v3802 = vsel %vm3473, %v3801, %v3379
        %v3803 = vrot.slane %v3387, 6
        %v3804 = vsel %vm3476, %v3803, %v3802
        %v3805 = vrot.slane %v3391, 5
        %v3806 = vsel %vm3479, %v3805, %v3804
        %v3807 = vrot.slane %v3395, 4
        %v3808 = vsel %vm3482, %v3807, %v3806
        %v3809 = vrot.slane %v3399, 3
        %v3810 = vsel %vm3485, %v3809, %v3808
        %v3811 = vrot.slane %v3403, 2
        %v3812 = vsel %vm3488, %v3811, %v3810
        %v3813 = vrot.slane %v3407, 1
        %v3814 = vsel %vm3491, %v3813, %v3812
        %v3815 = vrot.slane %v3412, 7
        %v3816 = vsel %vm3473, %v3815, %v3408
        %v3817 = vrot.slane %v3416, 6
        %v3818 = vsel %vm3476, %v3817, %v3816
        %v3819 = vrot.slane %v3420, 5
        %v3820 = vsel %vm3479, %v3819, %v3818
        %v3821 = vrot.slane %v3424, 4
        %v3822 = vsel %vm3482, %v3821, %v3820
        %v3823 = vrot.slane %v3428, 3
        %v3824 = vsel %vm3485, %v3823, %v3822
        %v3825 = vrot.slane %v3432, 2
        %v3826 = vsel %vm3488, %v3825, %v3824
        %v3827 = vrot.slane %v3436, 1
        %v3828 = vsel %vm3491, %v3827, %v3826
        %v3829 = vrot.slane %v3413, 7
        %v3830 = vsel %vm3473, %v3829, %v3409
        %v3831 = vrot.slane %v3417, 6
        %v3832 = vsel %vm3476, %v3831, %v3830
        %v3833 = vrot.slane %v3421, 5
        %v3834 = vsel %vm3479, %v3833, %v3832
        %v3835 = vrot.slane %v3425, 4
        %v3836 = vsel %vm3482, %v3835, %v3834
        %v3837 = vrot.slane %v3429, 3
        %v3838 = vsel %vm3485, %v3837, %v3836
        %v3839 = vrot.slane %v3433, 2
        %v3840 = vsel %vm3488, %v3839, %v3838
        %v3841 = vrot.slane %v3437, 1
        %v3842 = vsel %vm3491, %v3841, %v3840
        %v3843 = vrot.slane %v3414, 7
        %v3844 = vsel %vm3473, %v3843, %v3410
        %v3845 = vrot.slane %v3418, 6
        %v3846 = vsel %vm3476, %v3845, %v3844
        %v3847 = vrot.slane %v3422, 5
        %v3848 = vsel %vm3479, %v3847, %v3846
        %v3849 = vrot.slane %v3426, 4
        %v3850 = vsel %vm3482, %v3849, %v3848
        %v3851 = vrot.slane %v3430, 3
        %v3852 = vsel %vm3485, %v3851, %v3850
        %v3853 = vrot.slane %v3434, 2
        %v3854 = vsel %vm3488, %v3853, %v3852
        %v3855 = vrot.slane %v3438, 1
        %v3856 = vsel %vm3491, %v3855, %v3854
        %v3857 = vrot.slane %v3415, 7
        %v3858 = vsel %vm3473, %v3857, %v3411
        %v3859 = vrot.slane %v3419, 6
        %v3860 = vsel %vm3476, %v3859, %v3858
        %v3861 = vrot.slane %v3423, 5
        %v3862 = vsel %vm3479, %v3861, %v3860
        %v3863 = vrot.slane %v3427, 4
        %v3864 = vsel %vm3482, %v3863, %v3862
        %v3865 = vrot.slane %v3431, 3
        %v3866 = vsel %vm3485, %v3865, %v3864
        %v3867 = vrot.slane %v3435, 2
        %v3868 = vsel %vm3488, %v3867, %v3866
        %v3869 = vrot.slane %v3439, 1
        %v3870 = vsel %vm3491, %v3869, %v3868
        %v3871 = vrot.slane %v3444, 7
        %v3872 = vsel %vm3473, %v3871, %v3440
        %v3873 = vrot.slane %v3448, 6
        %v3874 = vsel %vm3476, %v3873, %v3872
        %v3875 = vrot.slane %v3452, 5
        %v3876 = vsel %vm3479, %v3875, %v3874
        %v3877 = vrot.slane %v3456, 4
        %v3878 = vsel %vm3482, %v3877, %v3876
        %v3879 = vrot.slane %v3460, 3
        %v3880 = vsel %vm3485, %v3879, %v3878
        %v3881 = vrot.slane %v3464, 2
        %v3882 = vsel %vm3488, %v3881, %v3880
        %v3883 = vrot.slane %v3468, 1
        %v3884 = vsel %vm3491, %v3883, %v3882
        %v3885 = vrot.slane %v3445, 7
        %v3886 = vsel %vm3473, %v3885, %v3441
        %v3887 = vrot.slane %v3449, 6
        %v3888 = vsel %vm3476, %v3887, %v3886
        %v3889 = vrot.slane %v3453, 5
        %v3890 = vsel %vm3479, %v3889, %v3888
        %v3891 = vrot.slane %v3457, 4
        %v3892 = vsel %vm3482, %v3891, %v3890
        %v3893 = vrot.slane %v3461, 3
        %v3894 = vsel %vm3485, %v3893, %v3892
        %v3895 = vrot.slane %v3465, 2
        %v3896 = vsel %vm3488, %v3895, %v3894
        %v3897 = vrot.slane %v3469, 1
        %v3898 = vsel %vm3491, %v3897, %v3896
        %v3899 = vrot.slane %v3446, 7
        %v3900 = vsel %vm3473, %v3899, %v3442
        %v3901 = vrot.slane %v3450, 6
        %v3902 = vsel %vm3476, %v3901, %v3900
        %v3903 = vrot.slane %v3454, 5
        %v3904 = vsel %vm3479, %v3903, %v3902
        %v3905 = vrot.slane %v3458, 4
        %v3906 = vsel %vm3482, %v3905, %v3904
        %v3907 = vrot.slane %v3462, 3
        %v3908 = vsel %vm3485, %v3907, %v3906
        %v3909 = vrot.slane %v3466, 2
        %v3910 = vsel %vm3488, %v3909, %v3908
        %v3911 = vrot.slane %v3470, 1
        %v3912 = vsel %vm3491, %v3911, %v3910
        %v3913 = vrot.slane %v3447, 7
        %v3914 = vsel %vm3473, %v3913, %v3443
        %v3915 = vrot.slane %v3451, 6
        %v3916 = vsel %vm3476, %v3915, %v3914
        %v3917 = vrot.slane %v3455, 5
        %v3918 = vsel %vm3479, %v3917, %v3916
        %v3919 = vrot.slane %v3459, 4
        %v3920 = vsel %vm3482, %v3919, %v3918
        %v3921 = vrot.slane %v3463, 3
        %v3922 = vsel %vm3485, %v3921, %v3920
        %v3923 = vrot.slane %v3467, 2
        %v3924 = vsel %vm3488, %v3923, %v3922
        %v3925 = vrot.slane %v3471, 1
        %v3926 = vsel %vm3491, %v3925, %v3924
        %v3927 = vpack.c.b16 %v3506, %v3492
        %v3928 = vpack.c.b16 %v3534, %v3520
        %v3929 = vpack.c.b16 %v3562, %v3548
        %v3930 = vpack.c.b16 %v3590, %v3576
        %v3931 = vpack.c.b16 %v3618, %v3604
        %v3932 = vpack.c.b16 %v3646, %v3632
        %v3933 = vpack.c.b16 %v3674, %v3660
        %v3934 = vpack.c.b16 %v3702, %v3688
        %v3935 = vpack.c.b16 %v3730, %v3716
        %v3936 = vpack.c.b16 %v3758, %v3744
        %v3937 = vpack.c.b16 %v3786, %v3772
        %v3938 = vpack.c.b16 %v3814, %v3800
        %v3939 = vpack.c.b16 %v3842, %v3828
        %v3940 = vpack.c.b16 %v3870, %v3856
        %v3941 = vpack.c.b16 %v3898, %v3884
        %v3942 = vpack.c.b16 %v3926, %v3912
        %3959 = vst [vmem:[%s221] sm:$0xff] %v3927
        %3960 = vst [vmem:[%s221 + $0x8] sm:$0xff] %v3928
        %3961 = vst [vmem:[%s221 + $0x10] sm:$0xff] %v3929
        %3962 = vst [vmem:[%s221 + $0x18] sm:$0xff] %v3930
        %3963 = vst [vmem:[%s221 + $0x20] sm:$0xff] %v3931
        %3964 = vst [vmem:[%s221 + $0x28] sm:$0xff] %v3932
        %3965 = vst [vmem:[%s221 + $0x30] sm:$0xff] %v3933
        %3966 = vst [vmem:[%s221 + $0x38] sm:$0xff] %v3934
        %3967 = vst [vmem:[%s221 + $0x40] sm:$0xff] %v3935
        %3968 = vst [vmem:[%s221 + $0x48] sm:$0xff] %v3936
        %3969 = vst [vmem:[%s221 + $0x50] sm:$0xff] %v3937
        %3970 = vst [vmem:[%s221 + $0x58] sm:$0xff] %v3938
        %3971 = vst [vmem:[%s221 + $0x60] sm:$0xff] %v3939
        %3972 = vst [vmem:[%s221 + $0x68] sm:$0xff] %v3940
        %3973 = vst [vmem:[%s221 + $0x70] sm:$0xff] %v3941
        %3974 = vst [vmem:[%s221 + $0x78] sm:$0xff] %v3942
        %s3975 = sand.u32 %s97, 1
        %s3976 = scalar_lea.sflag [#allocation4], %s3975
        %s3977 = sand.u32 %s97, 1
        %s3978 = smul.addr %s3977, 128
        %s3979 = scalar_lea.vmem [#allocation8], %s3978
        // Predicated region
        $region45: #{tpu_custom_call.1} parent=31 // pred_check
          %p3980 = pneg %p107
        $region46: #{tpu_custom_call.1} parent=31 // pred_check_branch
          %3982 = sbr.rel (%p3980) target = $region48
        $region47: #{tpu_custom_call.1} parent=31 // pred_region
          %3984 = vsyncadd %s3976, 0
          %s3985 = smul.addr %s21, 32
          %s3986 = smul.addr %s3985, 4
          %s3987 = scalar_lea.hbm %s3, %s3986
          %s3988 = sshll.u32 %s3979, 4
          %s3989 = int_to_ptr.vmem [resolvable:$true] %s3988
          %s3990 = sshll.u32 %s3987, 4
          %s3991 = int_to_ptr.hbm [resolvable:$true] %s3990
          %3996 = dma.vmem_to_hbm [thread:$0]  %s3989, 2048, %s3991, %s3976, 256, 256, 16
        $region48: #{tpu_custom_call.1} parent=31 // pred_fallthru
          _
      $region32: #{tpu_custom_call.1} parent=5 // pred_fallthru
        _
      %p3997 = scmp.le.s32.totalorder 2, %s16
      // Predicated region
      $region49: #{tpu_custom_call.1} parent=5 // pred_check
        %p3998 = pneg %p3997
      $region50: #{tpu_custom_call.1} parent=5 // pred_check_branch
        %4000 = sbr.rel (%p3998) target = $region52
      $region51: #{tpu_custom_call.1} parent=5 // pred_region
        %s4001 = ssub.s32 %s16, 2
        // Predicated region
        $region53: #{tpu_custom_call.1} parent=51 // pred_check
          %p4002 = pneg %p113
        $region54: #{tpu_custom_call.1} parent=51 // pred_check_branch
          %4004 = sbr.rel (%p4002) target = $region56
        $region55: #{tpu_custom_call.1} parent=51 // pred_region
          %s4005 = sand.u32 %s98, 1
          %s4006 = scalar_lea.sflag [#allocation4], %s4005
          %s4007 = sand.u32 %s98, 1
          %s4008 = smul.addr %s4007, 128
          %s4009 = scalar_lea.vmem [#allocation8], %s4008
          %4011 = dma.done %s4006, 2048
        $region56: #{tpu_custom_call.1} parent=51 // pred_fallthru
          _
      $region52: #{tpu_custom_call.1} parent=5 // pred_fallthru
        _
    $region6: #{tpu_custom_call.1} parent=1 // loop_footer
      %s20 = sadd.s32 1, %s16
    $region7: #{tpu_custom_call.1} parent=1 // loop_footer_branch
      %15 = sbr.rel target = $region3
    $region8: #{tpu_custom_call.1} parent=1 // loop_exit
      _
    %4012 = vsyncpa [#allocation3], 1
    %s4013 = scalar_lea.sflag [#allocation3], 1
    %4014 = vsyncpa %s4013, 1
    %4015 = vsyncpa [#allocation6], 1
    %4016 = vsyncpa [#allocation4], 1
    %s4017 = scalar_lea.sflag [#allocation4], 1
    %4018 = vsyncpa %s4017, 1

</llo_original>
